<compile_context>
chip_gen: v7x
topology: tpu7x:2x2x1
jax: 0.10.0
libtpu: 0.0.40
codegen_flags: <defaults>
</compile_context>

<pallas_src>
import functools

import jax
import jax.numpy as jnp
import numpy as np
from jax.experimental import pallas as pl
from jax.experimental.pallas import tpu as pltpu

EPS = 1e-6  # LayerNorm eps from the annotated transformer


# ----------------------------- kernel side -----------------------------

def _layernorm_in_kernel(x, a, b, *, approx):
    # annotated-transformer LayerNorm: a*(x-mean)/(std+eps)+b, *unbiased* std
    d = x.shape[-1]
    mean = jnp.mean(x, axis=-1, keepdims=True)
    xc = x - mean
    var = jnp.sum(xc * xc, axis=-1, keepdims=True) * (1.0 / (d - 1))
    inv = pl.reciprocal(jnp.sqrt(var) + EPS, approx=approx)
    return a * xc * inv + b


def encoder_stack_kernel(x_ref, mask_ref,
                         wq_ref, wk_ref, wv_ref, wo_ref,
                         bq_ref, bk_ref, bv_ref, bo_ref,
                         ln1a_ref, ln1b_ref, ln2a_ref, ln2b_ref,
                         w1_ref, b1_ref, w2_ref, b2_ref,
                         fna_ref, fnb_ref,
                         o_ref,
                         x_scr,
                         *, n_heads, compute_dtype, approx):
    layer = pl.program_id(1)
    n_layers = pl.num_programs(1)

    BB, S, D = x_ref.shape
    H = n_heads
    dk = D // H
    M = BB * S
    scale = 1.0 / (dk ** 0.5)

    # carry the activation in VMEM across the (inner, "arbitrary") layer axis
    @pl.when(layer == 0)
    def _():
        x_scr[...] = x_ref[...].reshape(M, D).astype(jnp.float32)

    x = x_scr[...]                                          # (M, D) f32

    # hoist per-layer params once per grid step (no re-broadcast per use)
    wq, wk, wv, wo = wq_ref[0], wk_ref[0], wv_ref[0], wo_ref[0]
    bq, bk, bv, bo = bq_ref[0], bk_ref[0], bv_ref[0], bo_ref[0]
    ln1a, ln1b = ln1a_ref[0], ln1b_ref[0]
    ln2a, ln2b = ln2a_ref[0], ln2b_ref[0]
    w1, b1, w2, b2 = w1_ref[0], b1_ref[0], w2_ref[0], b2_ref[0]

    # key-position mask, replicated per head (head-major leading batch axis)
    key_masked = jnp.concatenate([mask_ref[...]] * H, axis=0) == 0  # (H*BB,1,S)

    # ---------------- sublayer 0: x + self_attn(norm(x)) ----------------
    xn = _layernorm_in_kernel(x, ln1a, ln1b, approx=approx).astype(compute_dtype)
    q = jnp.dot(xn, wq, preferred_element_type=jnp.float32) + bq
    k = jnp.dot(xn, wk, preferred_element_type=jnp.float32) + bk
    v = jnp.dot(xn, wv, preferred_element_type=jnp.float32) + bv

    def split_heads(t):
        # (M, D) -> (H*BB, S, dk), head-major on the leading batch axis
        t3 = t.reshape(BB, S, D)
        return jnp.concatenate(
            [t3[:, :, h * dk:(h + 1) * dk] for h in range(H)], axis=0)

    qh = split_heads(q.astype(compute_dtype))
    kh = split_heads(k.astype(compute_dtype))
    vh = split_heads(v.astype(compute_dtype))

    # one batched contraction over all (batch, head) pairs
    scores = jnp.einsum("bqd,bkd->bqk", qh, kh,
                        preferred_element_type=jnp.float32) * scale
    scores = jnp.where(key_masked, jnp.float32(-1e9), scores)
    scores = scores - jnp.max(scores, axis=-1, keepdims=True)
    p = jnp.exp(scores)
    p = p * pl.reciprocal(jnp.sum(p, axis=-1, keepdims=True), approx=approx)

    ctx = jnp.einsum("bqk,bkd->bqd", p.astype(compute_dtype), vh,
                     preferred_element_type=jnp.float32)    # (H*BB, S, dk)
    ctx = jnp.concatenate([ctx[h * BB:(h + 1) * BB] for h in range(H)],
                          axis=-1).reshape(M, D)            # (M, D) f32
    attn = jnp.dot(ctx.astype(compute_dtype), wo,
                   preferred_element_type=jnp.float32) + bo
    x = x + attn

    # ---------------- sublayer 1: x + ffn(norm(x)) ----------------
    xn2 = _layernorm_in_kernel(x, ln2a, ln2b, approx=approx).astype(compute_dtype)
    h1 = jnp.maximum(
        jnp.dot(xn2, w1, preferred_element_type=jnp.float32) + b1, 0.0)
    ff = jnp.dot(h1.astype(compute_dtype), w2,
                 preferred_element_type=jnp.float32) + b2
    x = x + ff

    x_scr[...] = x

    # final LayerNorm fused into the last layer step
    @pl.when(layer == n_layers - 1)
    def _():
        xf = _layernorm_in_kernel(x, fna_ref[...], fnb_ref[...], approx=approx)
        o_ref[...] = xf.reshape(BB, S, D).astype(o_ref.dtype)


# ----------------------------- host side -----------------------------

def encoder_forward(x, mask, layer_params, norm_a, norm_b, *, n_heads,
                    compute_dtype=jnp.float32, batch_block=1):
    """Full encoder stack + final norm in a single pallas_call."""
    B, S, D = x.shape
    BB = batch_block
    assert B % BB == 0, "batch must be divisible by batch_block"
    n_layers = len(layer_params)
    d_ff = layer_params[0]["w1"].shape[1]
    approx = compute_dtype != jnp.float32

    def stack(name, dtype=jnp.float32):
        return jnp.stack([p[name] for p in layer_params]).astype(dtype)

    # matmul operands optionally bf16 (MXU-native, halves weight DMA);
    # biases / LayerNorm params stay f32.
    wq = stack("wq", compute_dtype); wk = stack("wk", compute_dtype)
    wv = stack("wv", compute_dtype); wo = stack("wo", compute_dtype)
    w1 = stack("w1", compute_dtype); w2 = stack("w2", compute_dtype)
    bq, bk, bv, bo = stack("bq"), stack("bk"), stack("bv"), stack("bo")
    ln1a, ln1b = stack("ln1a"), stack("ln1b")
    ln2a, ln2b = stack("ln2a"), stack("ln2b")
    b1, b2 = stack("b1"), stack("b2")

    def per_layer(shape):
        return pl.BlockSpec((1,) + shape, lambda b, l: (l,) + (0,) * len(shape))

    def shared(shape):
        return pl.BlockSpec(shape, lambda b, l: (0,) * len(shape))

    in_specs = [
        pl.BlockSpec((BB, S, D), lambda b, l: (b, 0, 0)),   # x
        pl.BlockSpec((BB, 1, S), lambda b, l: (b, 0, 0)),   # mask
        per_layer((D, D)), per_layer((D, D)), per_layer((D, D)), per_layer((D, D)),
        per_layer((1, D)), per_layer((1, D)), per_layer((1, D)), per_layer((1, D)),
        per_layer((1, D)), per_layer((1, D)), per_layer((1, D)), per_layer((1, D)),
        per_layer((D, d_ff)), per_layer((1, d_ff)),
        per_layer((d_ff, D)), per_layer((1, D)),
        shared((1, D)), shared((1, D)),                      # final norm a, b
    ]

    kernel = functools.partial(encoder_stack_kernel, n_heads=n_heads,
                               compute_dtype=compute_dtype, approx=approx)

    # TODO(synk): for production sizes on v7x (64 MiB VMEM) set vmem_limit_bytes
    # and tile S flash-style so the (S,S) / (S,d_ff) temporaries stay bounded.
    return pl.pallas_call(
        kernel,
        out_shape=jax.ShapeDtypeStruct((B, S, D), x.dtype),
        grid=(B // BB, n_layers),
        in_specs=in_specs,
        out_specs=pl.BlockSpec((BB, S, D), lambda b, l: (b, 0, 0)),
        scratch_shapes=[pltpu.VMEM((BB * S, D), jnp.float32)],
        compiler_params=pltpu.CompilerParams(
            dimension_semantics=("parallel", "arbitrary")),
    )(x, mask, wq, wk, wv, wo, bq, bk, bv, bo,
      ln1a, ln1b, ln2a, ln2b, w1, b1, w2, b2, norm_a, norm_b)


# ------------------------ pure-JAX reference ------------------------

def _layernorm_ref(x, a, b):
    d = x.shape[-1]
    mean = jnp.mean(x, axis=-1, keepdims=True)
    var = jnp.sum((x - mean) ** 2, axis=-1, keepdims=True) / (d - 1)
    return a * (x - mean) / (jnp.sqrt(var) + EPS) + b


def _ref_layer(x, mask, p, n_heads):
    B, S, D = x.shape
    dk = D // n_heads
    keym = (mask == 0)[:, :, None, :]                 # (B,1,1,S)
    xn = _layernorm_ref(x, p["ln1a"], p["ln1b"])
    q = xn @ p["wq"] + p["bq"]
    k = xn @ p["wk"] + p["bk"]
    v = xn @ p["wv"] + p["bv"]
    q = q.reshape(B, S, n_heads, dk).transpose(0, 2, 1, 3)
    k = k.reshape(B, S, n_heads, dk).transpose(0, 2, 1, 3)
    v = v.reshape(B, S, n_heads, dk).transpose(0, 2, 1, 3)
    s = jnp.einsum("bhqd,bhkd->bhqk", q, k) / jnp.sqrt(jnp.float32(dk))
    s = jnp.where(keym, -1e9, s)
    p_attn = jax.nn.softmax(s, axis=-1)
    a = jnp.einsum("bhqk,bhkd->bhqd", p_attn, v).transpose(0, 2, 1, 3).reshape(B, S, D)
    x = x + (a @ p["wo"] + p["bo"])
    xn2 = _layernorm_ref(x, p["ln2a"], p["ln2b"])
    ff = jnp.maximum(xn2 @ p["w1"] + p["b1"], 0.0) @ p["w2"] + p["b2"]
    return x + ff


def _ref_encoder(x, mask, layer_params, norm_a, norm_b, n_heads):
    for p in layer_params:
        x = _ref_layer(x, mask, p, n_heads)
    return _layernorm_ref(x, norm_a, norm_b)


# ------------------------------ main ------------------------------

def make_layer_params(key, d_model, d_ff):
    ks = jax.random.split(key, 6)
    n = lambda k, shp: (0.1 * jax.random.normal(k, shp)).astype(jnp.float32)
    return dict(
        wq=n(ks[0], (d_model, d_model)), bq=jnp.zeros((1, d_model), jnp.float32),
        wk=n(ks[1], (d_model, d_model)), bk=jnp.zeros((1, d_model), jnp.float32),
        wv=n(ks[2], (d_model, d_model)), bv=jnp.zeros((1, d_model), jnp.float32),
        wo=n(ks[3], (d_model, d_model)), bo=jnp.zeros((1, d_model), jnp.float32),
        ln1a=jnp.ones((1, d_model), jnp.float32), ln1b=jnp.zeros((1, d_model), jnp.float32),
        ln2a=jnp.ones((1, d_model), jnp.float32), ln2b=jnp.zeros((1, d_model), jnp.float32),
        w1=n(ks[4], (d_model, d_ff)), b1=jnp.zeros((1, d_ff), jnp.float32),
        w2=n(ks[5], (d_ff, d_model)), b2=jnp.zeros((1, d_model), jnp.float32),
    )


if __name__ == "__main__":
    B, S, D, H, DFF, NLAYERS = 2, 8, 32, 4, 64, 2

    key = jax.random.PRNGKey(0)
    kx, kmask, *kl = jax.random.split(key, 2 + NLAYERS)

    x = jax.random.normal(kx, (B, S, D), dtype=jnp.float32)
    # mask: (B, 1, S); last position of batch 1 masked out to exercise masking
    mask = jnp.ones((B, 1, S), dtype=jnp.int32).at[1, 0, S - 1].set(0)

    layer_params = [make_layer_params(kl[i], D, DFF) for i in range(NLAYERS)]
    norm_a = jnp.ones((1, D), jnp.float32)
    norm_b = jnp.zeros((1, D), jnp.float32)

    ref = _ref_encoder(x, mask, layer_params, norm_a, norm_b, H)

    # strict path: f32 matmuls, exact reciprocals -> tight check vs reference
    out = jax.block_until_ready(
        encoder_forward(x, mask, layer_params, norm_a, norm_b, n_heads=H))
    np.testing.assert_allclose(np.asarray(out), np.asarray(ref), rtol=1e-3, atol=1e-3)

    # fast path: bf16 MXU operands (f32 accumulation) + EUP approx reciprocals
    out_fast = jax.block_until_ready(
        encoder_forward(x, mask, layer_params, norm_a, norm_b, n_heads=H,
                        compute_dtype=jnp.bfloat16))
    np.testing.assert_allclose(np.asarray(out_fast), np.asarray(ref),
                               rtol=1e-1, atol=1e-1)

    # TODO(synk): dropout is treated as identity (eval mode); training-mode RNG
    # dropout would use pltpu.prng_seed / pltpu.stateful_bernoulli.
    print("KERNEL_OK")
</pallas_src>

<mosaic_0001>
module attributes {stable_mosaic.version = 11 : i64} {
  func.func @encoder_stack_kernel(%arg0: i32, %arg1: i32, %arg2: memref<1x8x32xf32, #tpu.memory_space<vmem>>, %arg3: memref<1x1x8xi32, #tpu.memory_space<vmem>>, %arg4: memref<1x32x32xf32, #tpu.memory_space<vmem>>, %arg5: memref<1x32x32xf32, #tpu.memory_space<vmem>>, %arg6: memref<1x32x32xf32, #tpu.memory_space<vmem>>, %arg7: memref<1x32x32xf32, #tpu.memory_space<vmem>>, %arg8: memref<1x1x32xf32, #tpu.memory_space<vmem>>, %arg9: memref<1x1x32xf32, #tpu.memory_space<vmem>>, %arg10: memref<1x1x32xf32, #tpu.memory_space<vmem>>, %arg11: memref<1x1x32xf32, #tpu.memory_space<vmem>>, %arg12: memref<1x1x32xf32, #tpu.memory_space<vmem>>, %arg13: memref<1x1x32xf32, #tpu.memory_space<vmem>>, %arg14: memref<1x1x32xf32, #tpu.memory_space<vmem>>, %arg15: memref<1x1x32xf32, #tpu.memory_space<vmem>>, %arg16: memref<1x32x64xf32, #tpu.memory_space<vmem>>, %arg17: memref<1x1x64xf32, #tpu.memory_space<vmem>>, %arg18: memref<1x64x32xf32, #tpu.memory_space<vmem>>, %arg19: memref<1x1x32xf32, #tpu.memory_space<vmem>>, %arg20: memref<1x32xf32, #tpu.memory_space<vmem>>, %arg21: memref<1x32xf32, #tpu.memory_space<vmem>>, %arg22: memref<1x8x32xf32, #tpu.memory_space<vmem>>, %arg23: memref<8x32xf32, #tpu.memory_space<vmem>>) attributes {dimension_semantics = [#tpu.dimension_semantics<parallel>, #tpu.dimension_semantics<arbitrary>], iteration_bounds = array<i64: 2, 2>, scalar_prefetch = 0 : i64, scratch_operands = 1 : i64, tpu.core_type = #tpu.core_type<tc>, window_params = [{transform_indices = @transform_0, window_bounds = array<i64: 1, 8, 32>}, {transform_indices = @transform_1, window_bounds = array<i64: 1, 1, 8>}, {transform_indices = @transform_2, window_bounds = array<i64: 1, 32, 32>}, {transform_indices = @transform_3, window_bounds = array<i64: 1, 32, 32>}, {transform_indices = @transform_4, window_bounds = array<i64: 1, 32, 32>}, {transform_indices = @transform_5, window_bounds = array<i64: 1, 32, 32>}, {transform_indices = @transform_6, window_bounds = array<i64: 1, 1, 32>}, {transform_indices = @transform_7, window_bounds = array<i64: 1, 1, 32>}, {transform_indices = @transform_8, window_bounds = array<i64: 1, 1, 32>}, {transform_indices = @transform_9, window_bounds = array<i64: 1, 1, 32>}, {transform_indices = @transform_10, window_bounds = array<i64: 1, 1, 32>}, {transform_indices = @transform_11, window_bounds = array<i64: 1, 1, 32>}, {transform_indices = @transform_12, window_bounds = array<i64: 1, 1, 32>}, {transform_indices = @transform_13, window_bounds = array<i64: 1, 1, 32>}, {transform_indices = @transform_14, window_bounds = array<i64: 1, 32, 64>}, {transform_indices = @transform_15, window_bounds = array<i64: 1, 1, 64>}, {transform_indices = @transform_16, window_bounds = array<i64: 1, 64, 32>}, {transform_indices = @transform_17, window_bounds = array<i64: 1, 1, 32>}, {pipeline_mode = #tpu.pipeline_mode<synchronous>, transform_indices = @transform_18, window_bounds = array<i64: 1, 32>}, {pipeline_mode = #tpu.pipeline_mode<synchronous>, transform_indices = @transform_19, window_bounds = array<i64: 1, 32>}, {transform_indices = @transform_20, window_bounds = array<i64: 1, 8, 32>}]} {
    %c0_i32 = arith.constant 0 : i32
    %0 = arith.cmpi eq, %arg1, %c0_i32 : i32
    %1 = arith.extui %0 : i1 to i32
    %c0_i32_0 = arith.constant 0 : i32
    %2 = arith.cmpi ne, %1, %c0_i32_0 : i32
    scf.if %2 {
      %c0_79 = arith.constant 0 : index
      %c0_80 = arith.constant 0 : index
      %c0_81 = arith.constant 0 : index
      %150 = vector.load %arg2[%c0_79, %c0_80, %c0_81] : memref<1x8x32xf32, #tpu.memory_space<vmem>>, vector<1x8x32xf32>
      %151 = vector.shape_cast %150 : vector<1x8x32xf32> to vector<8x32xf32>
      %c0_82 = arith.constant 0 : index
      %c0_83 = arith.constant 0 : index
      %152 = vector.load %arg23[%c0_82, %c0_83] : memref<8x32xf32, #tpu.memory_space<vmem>>, vector<8x32xf32>
      tpu.vector_store %arg23[%c0_82, %c0_83], %151 {strides = array<i32>} : memref<8x32xf32, #tpu.memory_space<vmem>>, vector<8x32xf32>,
    } else {
    }
    %c0 = arith.constant 0 : index
    %c0_1 = arith.constant 0 : index
    %3 = vector.load %arg23[%c0, %c0_1] : memref<8x32xf32, #tpu.memory_space<vmem>>, vector<8x32xf32>
    %c0_2 = arith.constant 0 : index
    %c0_3 = arith.constant 0 : index
    %c0_4 = arith.constant 0 : index
    %4 = vector.load %arg4[%c0_2, %c0_3, %c0_4] : memref<1x32x32xf32, #tpu.memory_space<vmem>>, vector<1x32x32xf32>
    %5 = vector.shape_cast %4 : vector<1x32x32xf32> to vector<32x32xf32>
    %c0_5 = arith.constant 0 : index
    %c0_6 = arith.constant 0 : index
    %c0_7 = arith.constant 0 : index
    %6 = vector.load %arg5[%c0_5, %c0_6, %c0_7] : memref<1x32x32xf32, #tpu.memory_space<vmem>>, vector<1x32x32xf32>
    %7 = vector.shape_cast %6 : vector<1x32x32xf32> to vector<32x32xf32>
    %c0_8 = arith.constant 0 : index
    %c0_9 = arith.constant 0 : index
    %c0_10 = arith.constant 0 : index
    %8 = vector.load %arg6[%c0_8, %c0_9, %c0_10] : memref<1x32x32xf32, #tpu.memory_space<vmem>>, vector<1x32x32xf32>
    %9 = vector.shape_cast %8 : vector<1x32x32xf32> to vector<32x32xf32>
    %c0_11 = arith.constant 0 : index
    %c0_12 = arith.constant 0 : index
    %c0_13 = arith.constant 0 : index
    %10 = vector.load %arg7[%c0_11, %c0_12, %c0_13] : memref<1x32x32xf32, #tpu.memory_space<vmem>>, vector<1x32x32xf32>
    %11 = vector.shape_cast %10 : vector<1x32x32xf32> to vector<32x32xf32>
    %c0_14 = arith.constant 0 : index
    %c0_15 = arith.constant 0 : index
    %c0_16 = arith.constant 0 : index
    %12 = vector.load %arg8[%c0_14, %c0_15, %c0_16] : memref<1x1x32xf32, #tpu.memory_space<vmem>>, vector<1x1x32xf32>
    %13 = vector.shape_cast %12 : vector<1x1x32xf32> to vector<1x32xf32>
    %c0_17 = arith.constant 0 : index
    %c0_18 = arith.constant 0 : index
    %c0_19 = arith.constant 0 : index
    %14 = vector.load %arg9[%c0_17, %c0_18, %c0_19] : memref<1x1x32xf32, #tpu.memory_space<vmem>>, vector<1x1x32xf32>
    %15 = vector.shape_cast %14 : vector<1x1x32xf32> to vector<1x32xf32>
    %c0_20 = arith.constant 0 : index
    %c0_21 = arith.constant 0 : index
    %c0_22 = arith.constant 0 : index
    %16 = vector.load %arg10[%c0_20, %c0_21, %c0_22] : memref<1x1x32xf32, #tpu.memory_space<vmem>>, vector<1x1x32xf32>
    %17 = vector.shape_cast %16 : vector<1x1x32xf32> to vector<1x32xf32>
    %c0_23 = arith.constant 0 : index
    %c0_24 = arith.constant 0 : index
    %c0_25 = arith.constant 0 : index
    %18 = vector.load %arg11[%c0_23, %c0_24, %c0_25] : memref<1x1x32xf32, #tpu.memory_space<vmem>>, vector<1x1x32xf32>
    %19 = vector.shape_cast %18 : vector<1x1x32xf32> to vector<1x32xf32>
    %c0_26 = arith.constant 0 : index
    %c0_27 = arith.constant 0 : index
    %c0_28 = arith.constant 0 : index
    %20 = vector.load %arg12[%c0_26, %c0_27, %c0_28] : memref<1x1x32xf32, #tpu.memory_space<vmem>>, vector<1x1x32xf32>
    %21 = vector.shape_cast %20 : vector<1x1x32xf32> to vector<1x32xf32>
    %c0_29 = arith.constant 0 : index
    %c0_30 = arith.constant 0 : index
    %c0_31 = arith.constant 0 : index
    %22 = vector.load %arg13[%c0_29, %c0_30, %c0_31] : memref<1x1x32xf32, #tpu.memory_space<vmem>>, vector<1x1x32xf32>
    %23 = vector.shape_cast %22 : vector<1x1x32xf32> to vector<1x32xf32>
    %c0_32 = arith.constant 0 : index
    %c0_33 = arith.constant 0 : index
    %c0_34 = arith.constant 0 : index
    %24 = vector.load %arg14[%c0_32, %c0_33, %c0_34] : memref<1x1x32xf32, #tpu.memory_space<vmem>>, vector<1x1x32xf32>
    %25 = vector.shape_cast %24 : vector<1x1x32xf32> to vector<1x32xf32>
    %c0_35 = arith.constant 0 : index
    %c0_36 = arith.constant 0 : index
    %c0_37 = arith.constant 0 : index
    %26 = vector.load %arg15[%c0_35, %c0_36, %c0_37] : memref<1x1x32xf32, #tpu.memory_space<vmem>>, vector<1x1x32xf32>
    %27 = vector.shape_cast %26 : vector<1x1x32xf32> to vector<1x32xf32>
    %c0_38 = arith.constant 0 : index
    %c0_39 = arith.constant 0 : index
    %c0_40 = arith.constant 0 : index
    %28 = vector.load %arg16[%c0_38, %c0_39, %c0_40] : memref<1x32x64xf32, #tpu.memory_space<vmem>>, vector<1x32x64xf32>
    %29 = vector.shape_cast %28 : vector<1x32x64xf32> to vector<32x64xf32>
    %c0_41 = arith.constant 0 : index
    %c0_42 = arith.constant 0 : index
    %c0_43 = arith.constant 0 : index
    %30 = vector.load %arg17[%c0_41, %c0_42, %c0_43] : memref<1x1x64xf32, #tpu.memory_space<vmem>>, vector<1x1x64xf32>
    %31 = vector.shape_cast %30 : vector<1x1x64xf32> to vector<1x64xf32>
    %c0_44 = arith.constant 0 : index
    %c0_45 = arith.constant 0 : index
    %c0_46 = arith.constant 0 : index
    %32 = vector.load %arg18[%c0_44, %c0_45, %c0_46] : memref<1x64x32xf32, #tpu.memory_space<vmem>>, vector<1x64x32xf32>
    %33 = vector.shape_cast %32 : vector<1x64x32xf32> to vector<64x32xf32>
    %c0_47 = arith.constant 0 : index
    %c0_48 = arith.constant 0 : index
    %c0_49 = arith.constant 0 : index
    %34 = vector.load %arg19[%c0_47, %c0_48, %c0_49] : memref<1x1x32xf32, #tpu.memory_space<vmem>>, vector<1x1x32xf32>
    %35 = vector.shape_cast %34 : vector<1x1x32xf32> to vector<1x32xf32>
    %c0_50 = arith.constant 0 : index
    %c0_51 = arith.constant 0 : index
    %c0_52 = arith.constant 0 : index
    %36 = vector.load %arg3[%c0_50, %c0_51, %c0_52] : memref<1x1x8xi32, #tpu.memory_space<vmem>>, vector<1x1x8xi32>
    %37 = tpu.concatenate %36, %36, %36, %36 in 0 : vector<1x1x8xi32>, vector<1x1x8xi32>, vector<1x1x8xi32>, vector<1x1x8xi32> -> vector<4x1x8xi32>
    %c0_i32_53 = arith.constant 0 : i32
    %38 = vector.broadcast %c0_i32_53 : i32 to vector<4x1x8xi32>
    %39 = arith.cmpi eq, %37, %38 : vector<4x1x8xi32>
    %cst = arith.constant dense<0.000000e+00> : vector<8xf32>
    %40 = vector.multi_reduction <add>, %3, %cst [1] : vector<8x32xf32> to vector<8xf32>
    %41 = vector.shape_cast %40 : vector<8xf32> to vector<8x1xf32>
    %cst_54 = arith.constant 3.200000e+01 : f32
    %42 = vector.broadcast %cst_54 : f32 to vector<8x1xf32>
    %43 = arith.divf %41, %42 : vector<8x1xf32>
    %44 = vector.broadcast %43 : vector<8x1xf32> to vector<8x32xf32>
    %45 = arith.subf %3, %44 : vector<8x32xf32>
    %46 = arith.mulf %45, %45 : vector<8x32xf32>
    %cst_55 = arith.constant dense<0.000000e+00> : vector<8xf32>
    %47 = vector.multi_reduction <add>, %46, %cst_55 [1] : vector<8x32xf32> to vector<8xf32>
    %48 = vector.shape_cast %47 : vector<8xf32> to vector<8x1xf32>
    %cst_56 = arith.constant 0.0322580636 : f32
    %49 = vector.broadcast %cst_56 : f32 to vector<8x1xf32>
    %50 = arith.mulf %48, %49 : vector<8x1xf32>
    %51 = math.sqrt %50 : vector<8x1xf32>
    %cst_57 = arith.constant 9.99999997E-7 : f32
    %52 = vector.broadcast %cst_57 : f32 to vector<8x1xf32>
    %53 = arith.addf %51, %52 : vector<8x1xf32>
    %54 = tpu.reciprocal %53 : vector<8x1xf32> -> vector<8x1xf32>
    %55 = vector.broadcast %21 : vector<1x32xf32> to vector<8x32xf32>
    %56 = arith.mulf %55, %45 : vector<8x32xf32>
    %57 = vector.broadcast %54 : vector<8x1xf32> to vector<8x32xf32>
    %58 = arith.mulf %56, %57 : vector<8x32xf32>
    %59 = vector.broadcast %23 : vector<1x32xf32> to vector<8x32xf32>
    %60 = arith.addf %58, %59 : vector<8x32xf32>
    %cst_58 = arith.constant dense<0.000000e+00> : vector<8x32xf32>
    %61 = tpu.matmul %60, %5, %cst_58 {dimension_numbers = #tpu.dot_dimension_numbers<[1], [0], [0], [1], [0, 0, 1, 1], [], []>} : vector<8x32xf32>, vector<32x32xf32>, vector<8x32xf32> -> vector<8x32xf32>
    %62 = vector.broadcast %13 : vector<1x32xf32> to vector<8x32xf32>
    %63 = arith.addf %61, %62 : vector<8x32xf32>
    %cst_59 = arith.constant dense<0.000000e+00> : vector<8x32xf32>
    %64 = tpu.matmul %60, %7, %cst_59 {dimension_numbers = #tpu.dot_dimension_numbers<[1], [0], [0], [1], [0, 0, 1, 1], [], []>} : vector<8x32xf32>, vector<32x32xf32>, vector<8x32xf32> -> vector<8x32xf32>
    %65 = vector.broadcast %15 : vector<1x32xf32> to vector<8x32xf32>
    %66 = arith.addf %64, %65 : vector<8x32xf32>
    %cst_60 = arith.constant dense<0.000000e+00> : vector<8x32xf32>
    %67 = tpu.matmul %60, %9, %cst_60 {dimension_numbers = #tpu.dot_dimension_numbers<[1], [0], [0], [1], [0, 0, 1, 1], [], []>} : vector<8x32xf32>, vector<32x32xf32>, vector<8x32xf32> -> vector<8x32xf32>
    %68 = vector.broadcast %17 : vector<1x32xf32> to vector<8x32xf32>
    %69 = arith.addf %67, %68 : vector<8x32xf32>
    %70 = vector.shape_cast %63 : vector<8x32xf32> to vector<1x8x32xf32>
    %71 = vector.extract_strided_slice %70 {offsets = [0, 0, 0], sizes = [1, 8, 8], strides = [1, 1, 1]} : vector<1x8x32xf32> to vector<1x8x8xf32>
    %72 = vector.extract_strided_slice %70 {offsets = [0, 0, 8], sizes = [1, 8, 8], strides = [1, 1, 1]} : vector<1x8x32xf32> to vector<1x8x8xf32>
    %73 = vector.extract_strided_slice %70 {offsets = [0, 0, 16], sizes = [1, 8, 8], strides = [1, 1, 1]} : vector<1x8x32xf32> to vector<1x8x8xf32>
    %74 = vector.extract_strided_slice %70 {offsets = [0, 0, 24], sizes = [1, 8, 8], strides = [1, 1, 1]} : vector<1x8x32xf32> to vector<1x8x8xf32>
    %75 = tpu.concatenate %71, %72, %73, %74 in 0 : vector<1x8x8xf32>, vector<1x8x8xf32>, vector<1x8x8xf32>, vector<1x8x8xf32> -> vector<4x8x8xf32>
    %76 = vector.shape_cast %66 : vector<8x32xf32> to vector<1x8x32xf32>
    %77 = vector.extract_strided_slice %76 {offsets = [0, 0, 0], sizes = [1, 8, 8], strides = [1, 1, 1]} : vector<1x8x32xf32> to vector<1x8x8xf32>
    %78 = vector.extract_strided_slice %76 {offsets = [0, 0, 8], sizes = [1, 8, 8], strides = [1, 1, 1]} : vector<1x8x32xf32> to vector<1x8x8xf32>
    %79 = vector.extract_strided_slice %76 {offsets = [0, 0, 16], sizes = [1, 8, 8], strides = [1, 1, 1]} : vector<1x8x32xf32> to vector<1x8x8xf32>
    %80 = vector.extract_strided_slice %76 {offsets = [0, 0, 24], sizes = [1, 8, 8], strides = [1, 1, 1]} : vector<1x8x32xf32> to vector<1x8x8xf32>
    %81 = tpu.concatenate %77, %78, %79, %80 in 0 : vector<1x8x8xf32>, vector<1x8x8xf32>, vector<1x8x8xf32>, vector<1x8x8xf32> -> vector<4x8x8xf32>
    %82 = vector.shape_cast %69 : vector<8x32xf32> to vector<1x8x32xf32>
    %83 = vector.extract_strided_slice %82 {offsets = [0, 0, 0], sizes = [1, 8, 8], strides = [1, 1, 1]} : vector<1x8x32xf32> to vector<1x8x8xf32>
    %84 = vector.extract_strided_slice %82 {offsets = [0, 0, 8], sizes = [1, 8, 8], strides = [1, 1, 1]} : vector<1x8x32xf32> to vector<1x8x8xf32>
    %85 = vector.extract_strided_slice %82 {offsets = [0, 0, 16], sizes = [1, 8, 8], strides = [1, 1, 1]} : vector<1x8x32xf32> to vector<1x8x8xf32>
    %86 = vector.extract_strided_slice %82 {offsets = [0, 0, 24], sizes = [1, 8, 8], strides = [1, 1, 1]} : vector<1x8x32xf32> to vector<1x8x8xf32>
    %87 = tpu.concatenate %83, %84, %85, %86 in 0 : vector<1x8x8xf32>, vector<1x8x8xf32>, vector<1x8x8xf32>, vector<1x8x8xf32> -> vector<4x8x8xf32>
    "tpu.trace_start"() <{level = 10 : i32, message = "bqd,bkd->bqk"}> : () -> ()
    %cst_61 = arith.constant dense<0.000000e+00> : vector<4x8x8xf32>
    %88 = tpu.matmul %75, %81, %cst_61 {dimension_numbers = #tpu.dot_dimension_numbers<[2], [2], [1], [1], [0, 0, 0, 1, 1, 1], [0], [0]>} : vector<4x8x8xf32>, vector<4x8x8xf32>, vector<4x8x8xf32> -> vector<4x8x8xf32>
    "tpu.trace_stop"() : () -> ()
    %cst_62 = arith.constant 0.353553385 : f32
    %89 = vector.broadcast %cst_62 : f32 to vector<4x8x8xf32>
    %90 = arith.mulf %88, %89 : vector<4x8x8xf32>
    %cst_63 = arith.constant -1.000000e+09 : f32
    %91 = vector.shape_cast %39 : vector<4x1x8xi1> to vector<4x1x8xi1>
    %92 = vector.broadcast %91 : vector<4x1x8xi1> to vector<4x8x8xi1>
    %93 = vector.broadcast %cst_63 : f32 to vector<4x8x8xf32>
    %94 = arith.select %92, %93, %90 : vector<4x8x8xi1>, vector<4x8x8xf32>
    %cst_64 = arith.constant dense<0xFF800000> : vector<4x8xf32>
    %95 = vector.multi_reduction <maximumf>, %94, %cst_64 [2] : vector<4x8x8xf32> to vector<4x8xf32>
    %96 = vector.shape_cast %95 : vector<4x8xf32> to vector<4x8x1xf32>
    %97 = vector.broadcast %96 : vector<4x8x1xf32> to vector<4x8x8xf32>
    %98 = arith.subf %94, %97 : vector<4x8x8xf32>
    %99 = math.exp %98 : vector<4x8x8xf32>
    %cst_65 = arith.constant dense<0.000000e+00> : vector<4x8xf32>
    %100 = vector.multi_reduction <add>, %99, %cst_65 [2] : vector<4x8x8xf32> to vector<4x8xf32>
    %101 = vector.shape_cast %100 : vector<4x8xf32> to vector<4x8x1xf32>
    %102 = tpu.reciprocal %101 : vector<4x8x1xf32> -> vector<4x8x1xf32>
    %103 = vector.broadcast %102 : vector<4x8x1xf32> to vector<4x8x8xf32>
    %104 = arith.mulf %99, %103 : vector<4x8x8xf32>
    "tpu.trace_start"() <{level = 10 : i32, message = "bqk,bkd->bqd"}> : () -> ()
    %cst_66 = arith.constant dense<0.000000e+00> : vector<4x8x8xf32>
    %105 = tpu.matmul %104, %87, %cst_66 {dimension_numbers = #tpu.dot_dimension_numbers<[2], [1], [1], [2], [0, 0, 0, 1, 1, 2], [0], [0]>} : vector<4x8x8xf32>, vector<4x8x8xf32>, vector<4x8x8xf32> -> vector<4x8x8xf32>
    "tpu.trace_stop"() : () -> ()
    %106 = vector.extract_strided_slice %105 {offsets = [0, 0, 0], sizes = [1, 8, 8], strides = [1, 1, 1]} : vector<4x8x8xf32> to vector<1x8x8xf32>
    %107 = vector.extract_strided_slice %105 {offsets = [1, 0, 0], sizes = [1, 8, 8], strides = [1, 1, 1]} : vector<4x8x8xf32> to vector<1x8x8xf32>
    %108 = vector.extract_strided_slice %105 {offsets = [2, 0, 0], sizes = [1, 8, 8], strides = [1, 1, 1]} : vector<4x8x8xf32> to vector<1x8x8xf32>
    %109 = vector.extract_strided_slice %105 {offsets = [3, 0, 0], sizes = [1, 8, 8], strides = [1, 1, 1]} : vector<4x8x8xf32> to vector<1x8x8xf32>
    %110 = tpu.concatenate %106, %107, %108, %109 in 2 : vector<1x8x8xf32>, vector<1x8x8xf32>, vector<1x8x8xf32>, vector<1x8x8xf32> -> vector<1x8x32xf32>
    %111 = vector.shape_cast %110 : vector<1x8x32xf32> to vector<8x32xf32>
    %cst_67 = arith.constant dense<0.000000e+00> : vector<8x32xf32>
    %112 = tpu.matmul %111, %11, %cst_67 {dimension_numbers = #tpu.dot_dimension_numbers<[1], [0], [0], [1], [0, 0, 1, 1], [], []>} : vector<8x32xf32>, vector<32x32xf32>, vector<8x32xf32> -> vector<8x32xf32>
    %113 = vector.broadcast %19 : vector<1x32xf32> to vector<8x32xf32>
    %114 = arith.addf %112, %113 : vector<8x32xf32>
    %115 = arith.addf %3, %114 : vector<8x32xf32>
    %cst_68 = arith.constant dense<0.000000e+00> : vector<8xf32>
    %116 = vector.multi_reduction <add>, %115, %cst_68 [1] : vector<8x32xf32> to vector<8xf32>
    %117 = vector.shape_cast %116 : vector<8xf32> to vector<8x1xf32>
    %cst_69 = arith.constant 3.200000e+01 : f32
    %118 = vector.broadcast %cst_69 : f32 to vector<8x1xf32>
    %119 = arith.divf %117, %118 : vector<8x1xf32>
    %120 = vector.broadcast %119 : vector<8x1xf32> to vector<8x32xf32>
    %121 = arith.subf %115, %120 : vector<8x32xf32>
    %122 = arith.mulf %121, %121 : vector<8x32xf32>
    %cst_70 = arith.constant dense<0.000000e+00> : vector<8xf32>
    %123 = vector.multi_reduction <add>, %122, %cst_70 [1] : vector<8x32xf32> to vector<8xf32>
    %124 = vector.shape_cast %123 : vector<8xf32> to vector<8x1xf32>
    %cst_71 = arith.constant 0.0322580636 : f32
    %125 = vector.broadcast %cst_71 : f32 to vector<8x1xf32>
    %126 = arith.mulf %124, %125 : vector<8x1xf32>
    %127 = math.sqrt %126 : vector<8x1xf32>
    %cst_72 = arith.constant 9.99999997E-7 : f32
    %128 = vector.broadcast %cst_72 : f32 to vector<8x1xf32>
    %129 = arith.addf %127, %128 : vector<8x1xf32>
    %130 = tpu.reciprocal %129 : vector<8x1xf32> -> vector<8x1xf32>
    %131 = vector.broadcast %25 : vector<1x32xf32> to vector<8x32xf32>
    %132 = arith.mulf %131, %121 : vector<8x32xf32>
    %133 = vector.broadcast %130 : vector<8x1xf32> to vector<8x32xf32>
    %134 = arith.mulf %132, %133 : vector<8x32xf32>
    %135 = vector.broadcast %27 : vector<1x32xf32> to vector<8x32xf32>
    %136 = arith.addf %134, %135 : vector<8x32xf32>
    %cst_73 = arith.constant dense<0.000000e+00> : vector<8x64xf32>
    %137 = tpu.matmul %136, %29, %cst_73 {dimension_numbers = #tpu.dot_dimension_numbers<[1], [0], [0], [1], [0, 0, 1, 1], [], []>} : vector<8x32xf32>, vector<32x64xf32>, vector<8x64xf32> -> vector<8x64xf32>
    %138 = vector.broadcast %31 : vector<1x64xf32> to vector<8x64xf32>
    %139 = arith.addf %137, %138 : vector<8x64xf32>
    %cst_74 = arith.constant 0.000000e+00 : f32
    %140 = vector.broadcast %cst_74 : f32 to vector<8x64xf32>
    %141 = arith.maximumf %139, %140 : vector<8x64xf32>
    %cst_75 = arith.constant dense<0.000000e+00> : vector<8x32xf32>
    %142 = tpu.matmul %141, %33, %cst_75 {dimension_numbers = #tpu.dot_dimension_numbers<[1], [0], [0], [1], [0, 0, 1, 1], [], []>} : vector<8x64xf32>, vector<64x32xf32>, vector<8x32xf32> -> vector<8x32xf32>
    %143 = vector.broadcast %35 : vector<1x32xf32> to vector<8x32xf32>
    %144 = arith.addf %142, %143 : vector<8x32xf32>
    %145 = arith.addf %115, %144 : vector<8x32xf32>
    %c0_76 = arith.constant 0 : index
    %c0_77 = arith.constant 0 : index
    %146 = vector.load %arg23[%c0_76, %c0_77] : memref<8x32xf32, #tpu.memory_space<vmem>>, vector<8x32xf32>
    tpu.vector_store %arg23[%c0_76, %c0_77], %145 {strides = array<i32>} : memref<8x32xf32, #tpu.memory_space<vmem>>, vector<8x32xf32>,
    %c1_i32 = arith.constant 1 : i32
    %147 = arith.cmpi eq, %arg1, %c1_i32 : i32
    %148 = arith.extui %147 : i1 to i32
    %c0_i32_78 = arith.constant 0 : i32
    %149 = arith.cmpi ne, %148, %c0_i32_78 : i32
    scf.if %149 {
      %c0_79 = arith.constant 0 : index
      %c0_80 = arith.constant 0 : index
      %150 = vector.load %arg20[%c0_79, %c0_80] : memref<1x32xf32, #tpu.memory_space<vmem>>, vector<1x32xf32>
      %c0_81 = arith.constant 0 : index
      %c0_82 = arith.constant 0 : index
      %151 = vector.load %arg21[%c0_81, %c0_82] : memref<1x32xf32, #tpu.memory_space<vmem>>, vector<1x32xf32>
      %cst_83 = arith.constant dense<0.000000e+00> : vector<8xf32>
      %152 = vector.multi_reduction <add>, %145, %cst_83 [1] : vector<8x32xf32> to vector<8xf32>
      %153 = vector.shape_cast %152 : vector<8xf32> to vector<8x1xf32>
      %cst_84 = arith.constant 3.200000e+01 : f32
      %154 = vector.broadcast %cst_84 : f32 to vector<8x1xf32>
      %155 = arith.divf %153, %154 : vector<8x1xf32>
      %156 = vector.broadcast %155 : vector<8x1xf32> to vector<8x32xf32>
      %157 = arith.subf %145, %156 : vector<8x32xf32>
      %158 = arith.mulf %157, %157 : vector<8x32xf32>
      %cst_85 = arith.constant dense<0.000000e+00> : vector<8xf32>
      %159 = vector.multi_reduction <add>, %158, %cst_85 [1] : vector<8x32xf32> to vector<8xf32>
      %160 = vector.shape_cast %159 : vector<8xf32> to vector<8x1xf32>
      %cst_86 = arith.constant 0.0322580636 : f32
      %161 = vector.broadcast %cst_86 : f32 to vector<8x1xf32>
      %162 = arith.mulf %160, %161 : vector<8x1xf32>
      %163 = math.sqrt %162 : vector<8x1xf32>
      %cst_87 = arith.constant 9.99999997E-7 : f32
      %164 = vector.broadcast %cst_87 : f32 to vector<8x1xf32>
      %165 = arith.addf %163, %164 : vector<8x1xf32>
      %166 = tpu.reciprocal %165 : vector<8x1xf32> -> vector<8x1xf32>
      %167 = vector.broadcast %150 : vector<1x32xf32> to vector<8x32xf32>
      %168 = arith.mulf %167, %157 : vector<8x32xf32>
      %169 = vector.broadcast %166 : vector<8x1xf32> to vector<8x32xf32>
      %170 = arith.mulf %168, %169 : vector<8x32xf32>
      %171 = vector.broadcast %151 : vector<1x32xf32> to vector<8x32xf32>
      %172 = arith.addf %170, %171 : vector<8x32xf32>
      %173 = vector.shape_cast %172 : vector<8x32xf32> to vector<1x8x32xf32>
      %c0_88 = arith.constant 0 : index
      %c0_89 = arith.constant 0 : index
      %c0_90 = arith.constant 0 : index
      %174 = vector.load %arg22[%c0_88, %c0_89, %c0_90] : memref<1x8x32xf32, #tpu.memory_space<vmem>>, vector<1x8x32xf32>
      tpu.vector_store %arg22[%c0_88, %c0_89, %c0_90], %173 {strides = array<i32>} : memref<1x8x32xf32, #tpu.memory_space<vmem>>, vector<1x8x32xf32>,
    } else {
    }
    return
  }
  func.func @transform_0(%arg0: i32, %arg1: i32) -> (i32, i32, i32) {
    %c0_i32 = arith.constant 0 : i32
    %c0_i32_0 = arith.constant 0 : i32
    %c0_i32_1 = arith.constant 0 : i32
    return %arg0, %c0_i32, %c0_i32_0 : i32, i32, i32
  }
  func.func @transform_1(%arg0: i32, %arg1: i32) -> (i32, i32, i32) {
    %c0_i32 = arith.constant 0 : i32
    %c0_i32_0 = arith.constant 0 : i32
    %c0_i32_1 = arith.constant 0 : i32
    return %arg0, %c0_i32, %c0_i32_0 : i32, i32, i32
  }
  func.func @transform_2(%arg0: i32, %arg1: i32) -> (i32, i32, i32) {
    %c0_i32 = arith.constant 0 : i32
    %c0_i32_0 = arith.constant 0 : i32
    %c0_i32_1 = arith.constant 0 : i32
    return %arg1, %c0_i32, %c0_i32_0 : i32, i32, i32
  }
  func.func @transform_3(%arg0: i32, %arg1: i32) -> (i32, i32, i32) {
    %c0_i32 = arith.constant 0 : i32
    %c0_i32_0 = arith.constant 0 : i32
    %c0_i32_1 = arith.constant 0 : i32
    return %arg1, %c0_i32, %c0_i32_0 : i32, i32, i32
  }
  func.func @transform_4(%arg0: i32, %arg1: i32) -> (i32, i32, i32) {
    %c0_i32 = arith.constant 0 : i32
    %c0_i32_0 = arith.constant 0 : i32
    %c0_i32_1 = arith.constant 0 : i32
    return %arg1, %c0_i32, %c0_i32_0 : i32, i32, i32
  }
  func.func @transform_5(%arg0: i32, %arg1: i32) -> (i32, i32, i32) {
    %c0_i32 = arith.constant 0 : i32
    %c0_i32_0 = arith.constant 0 : i32
    %c0_i32_1 = arith.constant 0 : i32
    return %arg1, %c0_i32, %c0_i32_0 : i32, i32, i32
  }
  func.func @transform_6(%arg0: i32, %arg1: i32) -> (i32, i32, i32) {
    %c0_i32 = arith.constant 0 : i32
    %c0_i32_0 = arith.constant 0 : i32
    %c0_i32_1 = arith.constant 0 : i32
    return %arg1, %c0_i32, %c0_i32_0 : i32, i32, i32
  }
  func.func @transform_7(%arg0: i32, %arg1: i32) -> (i32, i32, i32) {
    %c0_i32 = arith.constant 0 : i32
    %c0_i32_0 = arith.constant 0 : i32
    %c0_i32_1 = arith.constant 0 : i32
    return %arg1, %c0_i32, %c0_i32_0 : i32, i32, i32
  }
  func.func @transform_8(%arg0: i32, %arg1: i32) -> (i32, i32, i32) {
    %c0_i32 = arith.constant 0 : i32
    %c0_i32_0 = arith.constant 0 : i32
    %c0_i32_1 = arith.constant 0 : i32
    return %arg1, %c0_i32, %c0_i32_0 : i32, i32, i32
  }
  func.func @transform_9(%arg0: i32, %arg1: i32) -> (i32, i32, i32) {
    %c0_i32 = arith.constant 0 : i32
    %c0_i32_0 = arith.constant 0 : i32
    %c0_i32_1 = arith.constant 0 : i32
    return %arg1, %c0_i32, %c0_i32_0 : i32, i32, i32
  }
  func.func @transform_10(%arg0: i32, %arg1: i32) -> (i32, i32, i32) {
    %c0_i32 = arith.constant 0 : i32
    %c0_i32_0 = arith.constant 0 : i32
    %c0_i32_1 = arith.constant 0 : i32
    return %arg1, %c0_i32, %c0_i32_0 : i32, i32, i32
  }
  func.func @transform_11(%arg0: i32, %arg1: i32) -> (i32, i32, i32) {
    %c0_i32 = arith.constant 0 : i32
    %c0_i32_0 = arith.constant 0 : i32
    %c0_i32_1 = arith.constant 0 : i32
    return %arg1, %c0_i32, %c0_i32_0 : i32, i32, i32
  }
  func.func @transform_12(%arg0: i32, %arg1: i32) -> (i32, i32, i32) {
    %c0_i32 = arith.constant 0 : i32
    %c0_i32_0 = arith.constant 0 : i32
    %c0_i32_1 = arith.constant 0 : i32
    return %arg1, %c0_i32, %c0_i32_0 : i32, i32, i32
  }
  func.func @transform_13(%arg0: i32, %arg1: i32) -> (i32, i32, i32) {
    %c0_i32 = arith.constant 0 : i32
    %c0_i32_0 = arith.constant 0 : i32
    %c0_i32_1 = arith.constant 0 : i32
    return %arg1, %c0_i32, %c0_i32_0 : i32, i32, i32
  }
  func.func @transform_14(%arg0: i32, %arg1: i32) -> (i32, i32, i32) {
    %c0_i32 = arith.constant 0 : i32
    %c0_i32_0 = arith.constant 0 : i32
    %c0_i32_1 = arith.constant 0 : i32
    return %arg1, %c0_i32, %c0_i32_0 : i32, i32, i32
  }
  func.func @transform_15(%arg0: i32, %arg1: i32) -> (i32, i32, i32) {
    %c0_i32 = arith.constant 0 : i32
    %c0_i32_0 = arith.constant 0 : i32
    %c0_i32_1 = arith.constant 0 : i32
    return %arg1, %c0_i32, %c0_i32_0 : i32, i32, i32
  }
  func.func @transform_16(%arg0: i32, %arg1: i32) -> (i32, i32, i32) {
    %c0_i32 = arith.constant 0 : i32
    %c0_i32_0 = arith.constant 0 : i32
    %c0_i32_1 = arith.constant 0 : i32
    return %arg1, %c0_i32, %c0_i32_0 : i32, i32, i32
  }
  func.func @transform_17(%arg0: i32, %arg1: i32) -> (i32, i32, i32) {
    %c0_i32 = arith.constant 0 : i32
    %c0_i32_0 = arith.constant 0 : i32
    %c0_i32_1 = arith.constant 0 : i32
    return %arg1, %c0_i32, %c0_i32_0 : i32, i32, i32
  }
  func.func @transform_18(%arg0: i32, %arg1: i32) -> (i32, i32) {
    %c0_i32 = arith.constant 0 : i32
    %c0_i32_0 = arith.constant 0 : i32
    %c0_i32_1 = arith.constant 0 : i32
    return %c0_i32, %c0_i32_0 : i32, i32
  }
  func.func @transform_19(%arg0: i32, %arg1: i32) -> (i32, i32) {
    %c0_i32 = arith.constant 0 : i32
    %c0_i32_0 = arith.constant 0 : i32
    %c0_i32_1 = arith.constant 0 : i32
    return %c0_i32, %c0_i32_0 : i32, i32
  }
  func.func @transform_20(%arg0: i32, %arg1: i32) -> (i32, i32, i32) {
    %c0_i32 = arith.constant 0 : i32
    %c0_i32_0 = arith.constant 0 : i32
    %c0_i32_1 = arith.constant 0 : i32
    return %arg0, %c0_i32, %c0_i32_0 : i32, i32, i32
  }
}

</mosaic_0001>

<llo_original>
// kernel: tpu_custom_call.1
$region0: #{tpu_custom_call.1}
  #allocation0 [shape = 'u32[]', space=smem, size = 0x4, offset = 0x4, fixed_abs, tag = 'smem constant byte address 0x4 - core index']
  #allocation1 [shape = 'u32[144,128]{1,0:T(1,128)}', space=vmem, size = 0x12000, scoped, tag = 'internal scratch']
  #allocation2 [shape = 'f32[8,32]{1,0:T(8,128)}', space=vmem, size = 0x1000, scoped, tag = 'scratch operand']
  %s0 = inlined_call_operand.hbm [shape: f32[2,8,32], index: 0, kind: input, shape index: {}]
  %s1 = inlined_call_operand.vmem [shape: s32[2,1,8], index: 1, kind: input, shape index: {}]
  %s2 = inlined_call_operand.vmem [shape: f32[2,32,32], index: 2, kind: input, shape index: {}]
  %s3 = inlined_call_operand.vmem [shape: f32[2,32,32], index: 3, kind: input, shape index: {}]
  %s4 = inlined_call_operand.vmem [shape: f32[2,32,32], index: 4, kind: input, shape index: {}]
  %s5 = inlined_call_operand.hbm [shape: f32[2,32,32], index: 5, kind: input, shape index: {}]
  %s6 = inlined_call_operand.vmem [shape: f32[2,1,32], index: 6, kind: input, shape index: {}]
  %s7 = inlined_call_operand.vmem [shape: f32[2,1,32], index: 7, kind: input, shape index: {}]
  %s8 = inlined_call_operand.vmem [shape: f32[2,1,32], index: 8, kind: input, shape index: {}]
  %s9 = inlined_call_operand.vmem [shape: f32[2,1,32], index: 9, kind: input, shape index: {}]
  %s10 = inlined_call_operand.vmem [shape: f32[2,1,32], index: 10, kind: input, shape index: {}]
  %s11 = inlined_call_operand.vmem [shape: f32[2,1,32], index: 11, kind: input, shape index: {}]
  %s12 = inlined_call_operand.vmem [shape: f32[2,1,32], index: 12, kind: input, shape index: {}]
  %s13 = inlined_call_operand.vmem [shape: f32[2,1,32], index: 13, kind: input, shape index: {}]
  %s14 = inlined_call_operand.hbm [shape: f32[2,32,64], index: 14, kind: input, shape index: {}]
  %s15 = inlined_call_operand.vmem [shape: f32[2,1,64], index: 15, kind: input, shape index: {}]
  %s16 = inlined_call_operand.vmem [shape: f32[2,64,32], index: 16, kind: input, shape index: {}]
  %s17 = inlined_call_operand.vmem [shape: f32[2,1,32], index: 17, kind: input, shape index: {}]
  %s18 = inlined_call_operand.vmem [shape: f32[1,32], index: 18, kind: input, shape index: {}]
  %s19 = inlined_call_operand.vmem [shape: f32[1,32], index: 19, kind: input, shape index: {}]
  %s20 = inlined_call_operand.hbm [shape: f32[2,8,32], index: 20, kind: output, shape index: {}]
  %s21 = sld [smem:[#allocation0]]
  $region133: #{tpu_custom_call.1} parent=0
    _
  %s23 = ssub.s32 1, %s21
  %s24 = scalar_select 0, %s23, %s21
  $region1: #{tpu_custom_call.1} parent=0
    #allocation3 [shape = 'u8[8192]{0}', space=vmem, size = 0x2000, scoped, tag = 'input window, operand 0']
    #allocation4 [shape = 's32[2]{0}', space=sflag, size = 0x8, scoped, tag = 'scoped memory for tpu_custom_call.1']
    #allocation5 [shape = 's32[2]{0}', space=sflag, size = 0x8, scoped, tag = 'scoped memory for tpu_custom_call.1']
    #allocation6 [shape = 'u8[32768]{0}', space=vmem, size = 0x8000, scoped, tag = 'input window, operand 5']
    #allocation7 [shape = 's32[2]{0}', space=sflag, size = 0x8, scoped, tag = 'scoped memory for tpu_custom_call.1']
    #allocation8 [shape = 'u8[32768]{0}', space=vmem, size = 0x8000, scoped, tag = 'input window, operand 14']
    #allocation9 [shape = 'u8[8192]{0}', space=vmem, size = 0x2000, scoped, tag = 'output window, operand 0']
    %25 = vsyncpa [#allocation4], 0
    %s26 = scalar_lea.sflag [#allocation4], 1
    %27 = vsyncpa %s26, 0
    %28 = vsyncpa [#allocation7], 0
    %s29 = scalar_lea.sflag [#allocation7], 1
    %30 = vsyncpa %s29, 0
    %31 = vsyncpa [#allocation5], 0
    %s32 = scalar_lea.sflag [#allocation5], 1
    %33 = vsyncpa %s32, 0
    loop: start=0, step=1, limit=6
    $region2: #{tpu_custom_call.1} parent=1 // loop_pre_header
      _
    $region3: #{tpu_custom_call.1} parent=1 // loop_header
      %s35 = sphi 0, %s39
      %p36 = scmp.ge.s32.totalorder %s35, 6
      %s42 = sphi 0, %s54
      %s43 = sphi 0, %s50
      %s44 = sphi 0, %s42
      %s45 = sphi 0, %s43
      %s46 = sphi 0, %s44
      %s47 = sphi 0, %s45
      %s57 = sphi 0, %s59
      %s60 = sphi 0, %s57
      %s61 = sphi 0, %s60
      %s77 = sphi 0, %s61
      %s83 = sphi 0, %s85
      %s86 = sphi 0, %s83
      %s87 = sphi 0, %s86
      %s103 = sphi 0, %s87
      %s109 = sphi 0, %s111
      %s112 = sphi 0, %s109
      %s113 = sphi 0, %s112
      %s129 = sphi 0, %s113
      %s135 = sphi 0, %s137
      %s138 = sphi 0, %s135
      %s139 = sphi 0, %s138
      %s155 = sphi 0, %s139
      %s161 = sphi 0, %s163
      %s164 = sphi 0, %s161
      %s165 = sphi 0, %s164
      %s181 = sphi 0, %s165
      %s187 = sphi 0, %s189
      %s190 = sphi 0, %s187
      %s191 = sphi 0, %s190
      %s207 = sphi 0, %s191
      %s213 = sphi 0, %s215
      %s216 = sphi 0, %s213
      %s217 = sphi 0, %s216
      %s233 = sphi 0, %s217
      %s239 = sphi 0, %s241
      %s242 = sphi 0, %s239
      %s243 = sphi 0, %s242
      %s259 = sphi 0, %s243
      %s265 = sphi 0, %s267
      %s268 = sphi 0, %s265
      %s269 = sphi 0, %s268
      %s285 = sphi 0, %s269
      %s291 = sphi 0, %s293
      %s294 = sphi 0, %s291
      %s295 = sphi 0, %s294
      %s311 = sphi 0, %s295
      %s317 = sphi 0, %s319
      %s320 = sphi 0, %s317
      %s321 = sphi 0, %s320
      %s337 = sphi 0, %s321
      %s343 = sphi 0, %s345
      %s346 = sphi 0, %s343
      %s347 = sphi 0, %s346
      %s363 = sphi 0, %s347
      %s369 = sphi 0, %s371
      %s372 = sphi 0, %s369
      %s373 = sphi 0, %s372
      %s389 = sphi 0, %s373
      %s395 = sphi 0, %s397
      %s398 = sphi 0, %s395
      %s399 = sphi 0, %s398
      %s415 = sphi 0, %s399
      %s421 = sphi 0, %s423
      %s424 = sphi 0, %s421
      %s425 = sphi 0, %s424
      %s441 = sphi 0, %s425
      %s447 = sphi 0, %s449
      %s450 = sphi 0, %s447
      %s451 = sphi 0, %s450
      %s467 = sphi 0, %s451
      %s473 = sphi 0, %s475
      %s476 = sphi 0, %s473
      %s477 = sphi 0, %s476
      %s493 = sphi 0, %s477
      %s499 = sphi 0, %s501
      %s502 = sphi 0, %s499
      %s503 = sphi 0, %s502
      %s519 = sphi 0, %s503
      %s523 = sphi 0, %s523
      %s525 = sphi 0, %s523
      %s526 = sphi 0, %s525
      %s540 = sphi 0, %s526
      %s544 = sphi 0, %s544
      %s546 = sphi 0, %s544
      %s547 = sphi 0, %s546
      %s561 = sphi 0, %s547
      %s567 = sphi 0, %s569
      %s570 = sphi 0, %s567
      %s571 = sphi 0, %s570
      %s587 = sphi 0, %s571
    $region4: #{tpu_custom_call.1} parent=1 // loop_header_branch
      %38 = sbr.rel (%p36) target = $region8
    $region5: #{tpu_custom_call.1} parent=1 // loop_body
      %s40 = ssub.s32 %s35, 1
      %s41 = ssub.s32 %s35, 2
      %s48 = sadd.s32 1, %s43
      %p49 = scmp.ge.s32.totalorder %s48, 2
      %s50 = scalar_select %p49, 0, %s48
      %s51 = sadd.s32 1, %s42
      %s52 = scalar_select %p49, %s51, %s42
      %p53 = scmp.ge.s32.totalorder %s52, 2
      %s54 = scalar_select %p53, 0, %s52
      %s55 = ssub.s32 %s42, %s54
      %p56 = scmp.eq.s32.totalorder %s55, 0
      %s58 = sadd.s32 %s57, 1
      %s59 = scalar_select %p56, %s57, %s58
      %p62 = pneg %p56
      %p63 = scmp.eq.s32.totalorder %s35, 3
      %p64 = por %p62, %p63
      %p65 = scmp.ne.s32.totalorder %s57, %s60
      %p66 = scmp.eq.s32.totalorder %s35, 0
      %p67 = por %p65, %p66
      %p68 = scmp.ne.s32.totalorder %s57, %s60
      %p69 = scmp.eq.s32.totalorder %s40, 3
      %p70 = por %p68, %p69
      %p71 = scmp.ne.s32.totalorder %s60, %s61
      %p72 = scmp.eq.s32.totalorder %s40, 0
      %p73 = por %p71, %p72
      %p74 = scmp.ne.s32.totalorder %s60, %s61
      %p75 = scmp.eq.s32.totalorder %s41, 3
      %p76 = por %p74, %p75
      %p78 = scmp.ne.s32.totalorder %s61, %s77
      %p79 = scmp.eq.s32.totalorder %s41, 0
      %p80 = por %p78, %p79
      %s81 = ssub.s32 %s42, %s54
      %p82 = scmp.eq.s32.totalorder %s81, 0
      %s84 = sadd.s32 %s83, 1
      %s85 = scalar_select %p82, %s83, %s84
      %p88 = pneg %p82
      %p89 = scmp.eq.s32.totalorder %s35, 3
      %p90 = por %p88, %p89
      %p91 = scmp.ne.s32.totalorder %s83, %s86
      %p92 = scmp.eq.s32.totalorder %s35, 0
      %p93 = por %p91, %p92
      %p94 = scmp.ne.s32.totalorder %s83, %s86
      %p95 = scmp.eq.s32.totalorder %s40, 3
      %p96 = por %p94, %p95
      %p97 = scmp.ne.s32.totalorder %s86, %s87
      %p98 = scmp.eq.s32.totalorder %s40, 0
      %p99 = por %p97, %p98
      %p100 = scmp.ne.s32.totalorder %s86, %s87
      %p101 = scmp.eq.s32.totalorder %s41, 3
      %p102 = por %p100, %p101
      %p104 = scmp.ne.s32.totalorder %s87, %s103
      %p105 = scmp.eq.s32.totalorder %s41, 0
      %p106 = por %p104, %p105
      %s107 = ssub.s32 %s43, %s50
      %p108 = scmp.eq.s32.totalorder %s107, 0
      %s110 = sadd.s32 %s109, 1
      %s111 = scalar_select %p108, %s109, %s110
      %p114 = pneg %p108
      %p115 = scmp.eq.s32.totalorder %s35, 3
      %p116 = por %p114, %p115
      %p117 = scmp.ne.s32.totalorder %s109, %s112
      %p118 = scmp.eq.s32.totalorder %s35, 0
      %p119 = por %p117, %p118
      %p120 = scmp.ne.s32.totalorder %s109, %s112
      %p121 = scmp.eq.s32.totalorder %s40, 3
      %p122 = por %p120, %p121
      %p123 = scmp.ne.s32.totalorder %s112, %s113
      %p124 = scmp.eq.s32.totalorder %s40, 0
      %p125 = por %p123, %p124
      %p126 = scmp.ne.s32.totalorder %s112, %s113
      %p127 = scmp.eq.s32.totalorder %s41, 3
      %p128 = por %p126, %p127
      %p130 = scmp.ne.s32.totalorder %s113, %s129
      %p131 = scmp.eq.s32.totalorder %s41, 0
      %p132 = por %p130, %p131
      %s133 = ssub.s32 %s43, %s50
      %p134 = scmp.eq.s32.totalorder %s133, 0
      %s136 = sadd.s32 %s135, 1
      %s137 = scalar_select %p134, %s135, %s136
      %p140 = pneg %p134
      %p141 = scmp.eq.s32.totalorder %s35, 3
      %p142 = por %p140, %p141
      %p143 = scmp.ne.s32.totalorder %s135, %s138
      %p144 = scmp.eq.s32.totalorder %s35, 0
      %p145 = por %p143, %p144
      %p146 = scmp.ne.s32.totalorder %s135, %s138
      %p147 = scmp.eq.s32.totalorder %s40, 3
      %p148 = por %p146, %p147
      %p149 = scmp.ne.s32.totalorder %s138, %s139
      %p150 = scmp.eq.s32.totalorder %s40, 0
      %p151 = por %p149, %p150
      %p152 = scmp.ne.s32.totalorder %s138, %s139
      %p153 = scmp.eq.s32.totalorder %s41, 3
      %p154 = por %p152, %p153
      %p156 = scmp.ne.s32.totalorder %s139, %s155
      %p157 = scmp.eq.s32.totalorder %s41, 0
      %p158 = por %p156, %p157
      %s159 = ssub.s32 %s43, %s50
      %p160 = scmp.eq.s32.totalorder %s159, 0
      %s162 = sadd.s32 %s161, 1
      %s163 = scalar_select %p160, %s161, %s162
      %p166 = pneg %p160
      %p167 = scmp.eq.s32.totalorder %s35, 3
      %p168 = por %p166, %p167
      %p169 = scmp.ne.s32.totalorder %s161, %s164
      %p170 = scmp.eq.s32.totalorder %s35, 0
      %p171 = por %p169, %p170
      %p172 = scmp.ne.s32.totalorder %s161, %s164
      %p173 = scmp.eq.s32.totalorder %s40, 3
      %p174 = por %p172, %p173
      %p175 = scmp.ne.s32.totalorder %s164, %s165
      %p176 = scmp.eq.s32.totalorder %s40, 0
      %p177 = por %p175, %p176
      %p178 = scmp.ne.s32.totalorder %s164, %s165
      %p179 = scmp.eq.s32.totalorder %s41, 3
      %p180 = por %p178, %p179
      %p182 = scmp.ne.s32.totalorder %s165, %s181
      %p183 = scmp.eq.s32.totalorder %s41, 0
      %p184 = por %p182, %p183
      %s185 = ssub.s32 %s43, %s50
      %p186 = scmp.eq.s32.totalorder %s185, 0
      %s188 = sadd.s32 %s187, 1
      %s189 = scalar_select %p186, %s187, %s188
      %p192 = pneg %p186
      %p193 = scmp.eq.s32.totalorder %s35, 3
      %p194 = por %p192, %p193
      %p195 = scmp.ne.s32.totalorder %s187, %s190
      %p196 = scmp.eq.s32.totalorder %s35, 0
      %p197 = por %p195, %p196
      %p198 = scmp.ne.s32.totalorder %s187, %s190
      %p199 = scmp.eq.s32.totalorder %s40, 3
      %p200 = por %p198, %p199
      %p201 = scmp.ne.s32.totalorder %s190, %s191
      %p202 = scmp.eq.s32.totalorder %s40, 0
      %p203 = por %p201, %p202
      %p204 = scmp.ne.s32.totalorder %s190, %s191
      %p205 = scmp.eq.s32.totalorder %s41, 3
      %p206 = por %p204, %p205
      %p208 = scmp.ne.s32.totalorder %s191, %s207
      %p209 = scmp.eq.s32.totalorder %s41, 0
      %p210 = por %p208, %p209
      %s211 = ssub.s32 %s43, %s50
      %p212 = scmp.eq.s32.totalorder %s211, 0
      %s214 = sadd.s32 %s213, 1
      %s215 = scalar_select %p212, %s213, %s214
      %p218 = pneg %p212
      %p219 = scmp.eq.s32.totalorder %s35, 3
      %p220 = por %p218, %p219
      %p221 = scmp.ne.s32.totalorder %s213, %s216
      %p222 = scmp.eq.s32.totalorder %s35, 0
      %p223 = por %p221, %p222
      %p224 = scmp.ne.s32.totalorder %s213, %s216
      %p225 = scmp.eq.s32.totalorder %s40, 3
      %p226 = por %p224, %p225
      %p227 = scmp.ne.s32.totalorder %s216, %s217
      %p228 = scmp.eq.s32.totalorder %s40, 0
      %p229 = por %p227, %p228
      %p230 = scmp.ne.s32.totalorder %s216, %s217
      %p231 = scmp.eq.s32.totalorder %s41, 3
      %p232 = por %p230, %p231
      %p234 = scmp.ne.s32.totalorder %s217, %s233
      %p235 = scmp.eq.s32.totalorder %s41, 0
      %p236 = por %p234, %p235
      %s237 = ssub.s32 %s43, %s50
      %p238 = scmp.eq.s32.totalorder %s237, 0
      %s240 = sadd.s32 %s239, 1
      %s241 = scalar_select %p238, %s239, %s240
      %p244 = pneg %p238
      %p245 = scmp.eq.s32.totalorder %s35, 3
      %p246 = por %p244, %p245
      %p247 = scmp.ne.s32.totalorder %s239, %s242
      %p248 = scmp.eq.s32.totalorder %s35, 0
      %p249 = por %p247, %p248
      %p250 = scmp.ne.s32.totalorder %s239, %s242
      %p251 = scmp.eq.s32.totalorder %s40, 3
      %p252 = por %p250, %p251
      %p253 = scmp.ne.s32.totalorder %s242, %s243
      %p254 = scmp.eq.s32.totalorder %s40, 0
      %p255 = por %p253, %p254
      %p256 = scmp.ne.s32.totalorder %s242, %s243
      %p257 = scmp.eq.s32.totalorder %s41, 3
      %p258 = por %p256, %p257
      %p260 = scmp.ne.s32.totalorder %s243, %s259
      %p261 = scmp.eq.s32.totalorder %s41, 0
      %p262 = por %p260, %p261
      %s263 = ssub.s32 %s43, %s50
      %p264 = scmp.eq.s32.totalorder %s263, 0
      %s266 = sadd.s32 %s265, 1
      %s267 = scalar_select %p264, %s265, %s266
      %p270 = pneg %p264
      %p271 = scmp.eq.s32.totalorder %s35, 3
      %p272 = por %p270, %p271
      %p273 = scmp.ne.s32.totalorder %s265, %s268
      %p274 = scmp.eq.s32.totalorder %s35, 0
      %p275 = por %p273, %p274
      %p276 = scmp.ne.s32.totalorder %s265, %s268
      %p277 = scmp.eq.s32.totalorder %s40, 3
      %p278 = por %p276, %p277
      %p279 = scmp.ne.s32.totalorder %s268, %s269
      %p280 = scmp.eq.s32.totalorder %s40, 0
      %p281 = por %p279, %p280
      %p282 = scmp.ne.s32.totalorder %s268, %s269
      %p283 = scmp.eq.s32.totalorder %s41, 3
      %p284 = por %p282, %p283
      %p286 = scmp.ne.s32.totalorder %s269, %s285
      %p287 = scmp.eq.s32.totalorder %s41, 0
      %p288 = por %p286, %p287
      %s289 = ssub.s32 %s43, %s50
      %p290 = scmp.eq.s32.totalorder %s289, 0
      %s292 = sadd.s32 %s291, 1
      %s293 = scalar_select %p290, %s291, %s292
      %p296 = pneg %p290
      %p297 = scmp.eq.s32.totalorder %s35, 3
      %p298 = por %p296, %p297
      %p299 = scmp.ne.s32.totalorder %s291, %s294
      %p300 = scmp.eq.s32.totalorder %s35, 0
      %p301 = por %p299, %p300
      %p302 = scmp.ne.s32.totalorder %s291, %s294
      %p303 = scmp.eq.s32.totalorder %s40, 3
      %p304 = por %p302, %p303
      %p305 = scmp.ne.s32.totalorder %s294, %s295
      %p306 = scmp.eq.s32.totalorder %s40, 0
      %p307 = por %p305, %p306
      %p308 = scmp.ne.s32.totalorder %s294, %s295
      %p309 = scmp.eq.s32.totalorder %s41, 3
      %p310 = por %p308, %p309
      %p312 = scmp.ne.s32.totalorder %s295, %s311
      %p313 = scmp.eq.s32.totalorder %s41, 0
      %p314 = por %p312, %p313
      %s315 = ssub.s32 %s43, %s50
      %p316 = scmp.eq.s32.totalorder %s315, 0
      %s318 = sadd.s32 %s317, 1
      %s319 = scalar_select %p316, %s317, %s318
      %p322 = pneg %p316
      %p323 = scmp.eq.s32.totalorder %s35, 3
      %p324 = por %p322, %p323
      %p325 = scmp.ne.s32.totalorder %s317, %s320
      %p326 = scmp.eq.s32.totalorder %s35, 0
      %p327 = por %p325, %p326
      %p328 = scmp.ne.s32.totalorder %s317, %s320
      %p329 = scmp.eq.s32.totalorder %s40, 3
      %p330 = por %p328, %p329
      %p331 = scmp.ne.s32.totalorder %s320, %s321
      %p332 = scmp.eq.s32.totalorder %s40, 0
      %p333 = por %p331, %p332
      %p334 = scmp.ne.s32.totalorder %s320, %s321
      %p335 = scmp.eq.s32.totalorder %s41, 3
      %p336 = por %p334, %p335
      %p338 = scmp.ne.s32.totalorder %s321, %s337
      %p339 = scmp.eq.s32.totalorder %s41, 0
      %p340 = por %p338, %p339
      %s341 = ssub.s32 %s43, %s50
      %p342 = scmp.eq.s32.totalorder %s341, 0
      %s344 = sadd.s32 %s343, 1
      %s345 = scalar_select %p342, %s343, %s344
      %p348 = pneg %p342
      %p349 = scmp.eq.s32.totalorder %s35, 3
      %p350 = por %p348, %p349
      %p351 = scmp.ne.s32.totalorder %s343, %s346
      %p352 = scmp.eq.s32.totalorder %s35, 0
      %p353 = por %p351, %p352
      %p354 = scmp.ne.s32.totalorder %s343, %s346
      %p355 = scmp.eq.s32.totalorder %s40, 3
      %p356 = por %p354, %p355
      %p357 = scmp.ne.s32.totalorder %s346, %s347
      %p358 = scmp.eq.s32.totalorder %s40, 0
      %p359 = por %p357, %p358
      %p360 = scmp.ne.s32.totalorder %s346, %s347
      %p361 = scmp.eq.s32.totalorder %s41, 3
      %p362 = por %p360, %p361
      %p364 = scmp.ne.s32.totalorder %s347, %s363
      %p365 = scmp.eq.s32.totalorder %s41, 0
      %p366 = por %p364, %p365
      %s367 = ssub.s32 %s43, %s50
      %p368 = scmp.eq.s32.totalorder %s367, 0
      %s370 = sadd.s32 %s369, 1
      %s371 = scalar_select %p368, %s369, %s370
      %p374 = pneg %p368
      %p375 = scmp.eq.s32.totalorder %s35, 3
      %p376 = por %p374, %p375
      %p377 = scmp.ne.s32.totalorder %s369, %s372
      %p378 = scmp.eq.s32.totalorder %s35, 0
      %p379 = por %p377, %p378
      %p380 = scmp.ne.s32.totalorder %s369, %s372
      %p381 = scmp.eq.s32.totalorder %s40, 3
      %p382 = por %p380, %p381
      %p383 = scmp.ne.s32.totalorder %s372, %s373
      %p384 = scmp.eq.s32.totalorder %s40, 0
      %p385 = por %p383, %p384
      %p386 = scmp.ne.s32.totalorder %s372, %s373
      %p387 = scmp.eq.s32.totalorder %s41, 3
      %p388 = por %p386, %p387
      %p390 = scmp.ne.s32.totalorder %s373, %s389
      %p391 = scmp.eq.s32.totalorder %s41, 0
      %p392 = por %p390, %p391
      %s393 = ssub.s32 %s43, %s50
      %p394 = scmp.eq.s32.totalorder %s393, 0
      %s396 = sadd.s32 %s395, 1
      %s397 = scalar_select %p394, %s395, %s396
      %p400 = pneg %p394
      %p401 = scmp.eq.s32.totalorder %s35, 3
      %p402 = por %p400, %p401
      %p403 = scmp.ne.s32.totalorder %s395, %s398
      %p404 = scmp.eq.s32.totalorder %s35, 0
      %p405 = por %p403, %p404
      %p406 = scmp.ne.s32.totalorder %s395, %s398
      %p407 = scmp.eq.s32.totalorder %s40, 3
      %p408 = por %p406, %p407
      %p409 = scmp.ne.s32.totalorder %s398, %s399
      %p410 = scmp.eq.s32.totalorder %s40, 0
      %p411 = por %p409, %p410
      %p412 = scmp.ne.s32.totalorder %s398, %s399
      %p413 = scmp.eq.s32.totalorder %s41, 3
      %p414 = por %p412, %p413
      %p416 = scmp.ne.s32.totalorder %s399, %s415
      %p417 = scmp.eq.s32.totalorder %s41, 0
      %p418 = por %p416, %p417
      %s419 = ssub.s32 %s43, %s50
      %p420 = scmp.eq.s32.totalorder %s419, 0
      %s422 = sadd.s32 %s421, 1
      %s423 = scalar_select %p420, %s421, %s422
      %p426 = pneg %p420
      %p427 = scmp.eq.s32.totalorder %s35, 3
      %p428 = por %p426, %p427
      %p429 = scmp.ne.s32.totalorder %s421, %s424
      %p430 = scmp.eq.s32.totalorder %s35, 0
      %p431 = por %p429, %p430
      %p432 = scmp.ne.s32.totalorder %s421, %s424
      %p433 = scmp.eq.s32.totalorder %s40, 3
      %p434 = por %p432, %p433
      %p435 = scmp.ne.s32.totalorder %s424, %s425
      %p436 = scmp.eq.s32.totalorder %s40, 0
      %p437 = por %p435, %p436
      %p438 = scmp.ne.s32.totalorder %s424, %s425
      %p439 = scmp.eq.s32.totalorder %s41, 3
      %p440 = por %p438, %p439
      %p442 = scmp.ne.s32.totalorder %s425, %s441
      %p443 = scmp.eq.s32.totalorder %s41, 0
      %p444 = por %p442, %p443
      %s445 = ssub.s32 %s43, %s50
      %p446 = scmp.eq.s32.totalorder %s445, 0
      %s448 = sadd.s32 %s447, 1
      %s449 = scalar_select %p446, %s447, %s448
      %p452 = pneg %p446
      %p453 = scmp.eq.s32.totalorder %s35, 3
      %p454 = por %p452, %p453
      %p455 = scmp.ne.s32.totalorder %s447, %s450
      %p456 = scmp.eq.s32.totalorder %s35, 0
      %p457 = por %p455, %p456
      %p458 = scmp.ne.s32.totalorder %s447, %s450
      %p459 = scmp.eq.s32.totalorder %s40, 3
      %p460 = por %p458, %p459
      %p461 = scmp.ne.s32.totalorder %s450, %s451
      %p462 = scmp.eq.s32.totalorder %s40, 0
      %p463 = por %p461, %p462
      %p464 = scmp.ne.s32.totalorder %s450, %s451
      %p465 = scmp.eq.s32.totalorder %s41, 3
      %p466 = por %p464, %p465
      %p468 = scmp.ne.s32.totalorder %s451, %s467
      %p469 = scmp.eq.s32.totalorder %s41, 0
      %p470 = por %p468, %p469
      %s471 = ssub.s32 %s43, %s50
      %p472 = scmp.eq.s32.totalorder %s471, 0
      %s474 = sadd.s32 %s473, 1
      %s475 = scalar_select %p472, %s473, %s474
      %p478 = pneg %p472
      %p479 = scmp.eq.s32.totalorder %s35, 3
      %p480 = por %p478, %p479
      %p481 = scmp.ne.s32.totalorder %s473, %s476
      %p482 = scmp.eq.s32.totalorder %s35, 0
      %p483 = por %p481, %p482
      %p484 = scmp.ne.s32.totalorder %s473, %s476
      %p485 = scmp.eq.s32.totalorder %s40, 3
      %p486 = por %p484, %p485
      %p487 = scmp.ne.s32.totalorder %s476, %s477
      %p488 = scmp.eq.s32.totalorder %s40, 0
      %p489 = por %p487, %p488
      %p490 = scmp.ne.s32.totalorder %s476, %s477
      %p491 = scmp.eq.s32.totalorder %s41, 3
      %p492 = por %p490, %p491
      %p494 = scmp.ne.s32.totalorder %s477, %s493
      %p495 = scmp.eq.s32.totalorder %s41, 0
      %p496 = por %p494, %p495
      %s497 = ssub.s32 %s43, %s50
      %p498 = scmp.eq.s32.totalorder %s497, 0
      %s500 = sadd.s32 %s499, 1
      %s501 = scalar_select %p498, %s499, %s500
      %p504 = pneg %p498
      %p505 = scmp.eq.s32.totalorder %s35, 3
      %p506 = por %p504, %p505
      %p507 = scmp.ne.s32.totalorder %s499, %s502
      %p508 = scmp.eq.s32.totalorder %s35, 0
      %p509 = por %p507, %p508
      %p510 = scmp.ne.s32.totalorder %s499, %s502
      %p511 = scmp.eq.s32.totalorder %s40, 3
      %p512 = por %p510, %p511
      %p513 = scmp.ne.s32.totalorder %s502, %s503
      %p514 = scmp.eq.s32.totalorder %s40, 0
      %p515 = por %p513, %p514
      %p516 = scmp.ne.s32.totalorder %s502, %s503
      %p517 = scmp.eq.s32.totalorder %s41, 3
      %p518 = por %p516, %p517
      %p520 = scmp.ne.s32.totalorder %s503, %s519
      %p521 = scmp.eq.s32.totalorder %s41, 0
      %p522 = por %p520, %p521
      %s524 = sadd.s32 %s523, 1
      %p527 = scmp.eq.s32.totalorder %s35, 3
      %p528 = scmp.ne.s32.totalorder %s523, %s525
      %p529 = scmp.eq.s32.totalorder %s35, 0
      %p530 = por %p528, %p529
      %p531 = scmp.ne.s32.totalorder %s523, %s525
      %p532 = scmp.eq.s32.totalorder %s40, 3
      %p533 = por %p531, %p532
      %p534 = scmp.ne.s32.totalorder %s525, %s526
      %p535 = scmp.eq.s32.totalorder %s40, 0
      %p536 = por %p534, %p535
      %p537 = scmp.ne.s32.totalorder %s525, %s526
      %p538 = scmp.eq.s32.totalorder %s41, 3
      %p539 = por %p537, %p538
      %p541 = scmp.ne.s32.totalorder %s526, %s540
      %p542 = scmp.eq.s32.totalorder %s41, 0
      %p543 = por %p541, %p542
      %s545 = sadd.s32 %s544, 1
      %p548 = scmp.eq.s32.totalorder %s35, 3
      %p549 = scmp.ne.s32.totalorder %s544, %s546
      %p550 = scmp.eq.s32.totalorder %s35, 0
      %p551 = por %p549, %p550
      %p552 = scmp.ne.s32.totalorder %s544, %s546
      %p553 = scmp.eq.s32.totalorder %s40, 3
      %p554 = por %p552, %p553
      %p555 = scmp.ne.s32.totalorder %s546, %s547
      %p556 = scmp.eq.s32.totalorder %s40, 0
      %p557 = por %p555, %p556
      %p558 = scmp.ne.s32.totalorder %s546, %s547
      %p559 = scmp.eq.s32.totalorder %s41, 3
      %p560 = por %p558, %p559
      %p562 = scmp.ne.s32.totalorder %s547, %s561
      %p563 = scmp.eq.s32.totalorder %s41, 0
      %p564 = por %p562, %p563
      %s565 = ssub.s32 %s42, %s54
      %p566 = scmp.eq.s32.totalorder %s565, 0
      %s568 = sadd.s32 %s567, 1
      %s569 = scalar_select %p566, %s567, %s568
      %p572 = pneg %p566
      %p573 = scmp.eq.s32.totalorder %s35, 3
      %p574 = por %p572, %p573
      %p575 = scmp.ne.s32.totalorder %s567, %s570
      %p576 = scmp.eq.s32.totalorder %s35, 0
      %p577 = por %p575, %p576
      %p578 = scmp.ne.s32.totalorder %s567, %s570
      %p579 = scmp.eq.s32.totalorder %s40, 3
      %p580 = por %p578, %p579
      %p581 = scmp.ne.s32.totalorder %s570, %s571
      %p582 = scmp.eq.s32.totalorder %s40, 0
      %p583 = por %p581, %p582
      %p584 = scmp.ne.s32.totalorder %s570, %s571
      %p585 = scmp.eq.s32.totalorder %s41, 3
      %p586 = por %p584, %p585
      %p588 = scmp.ne.s32.totalorder %s571, %s587
      %p589 = scmp.eq.s32.totalorder %s41, 0
      %p590 = por %p588, %p589
      %p591 = scmp.le.s32.totalorder 1, %s35
      %p592 = scmp.lt.s32.totalorder %s35, 5
      %p593 = pnand %p591, %p592
      %p594 = pneg %p593
      // Predicated region
      $region9: #{tpu_custom_call.1} parent=5 // pred_check
        _
      $region10: #{tpu_custom_call.1} parent=5 // pred_check_branch
        %596 = sbr.rel (%p593) target = $region12
      $region11: #{tpu_custom_call.1} parent=5 // pred_region
        %s597 = ssub.s32 %s35, 1
        // Predicated region
        $region13: #{tpu_custom_call.1} parent=11 // pred_check
          %p598 = pneg %p536
        $region14: #{tpu_custom_call.1} parent=11 // pred_check_branch
          %600 = sbr.rel (%p598) target = $region16
        $region15: #{tpu_custom_call.1} parent=11 // pred_region
          _
        $region16: #{tpu_custom_call.1} parent=11 // pred_fallthru
          _
        // Predicated region
        $region17: #{tpu_custom_call.1} parent=11 // pred_check
          %p601 = pneg %p557
        $region18: #{tpu_custom_call.1} parent=11 // pred_check_branch
          %603 = sbr.rel (%p601) target = $region20
        $region19: #{tpu_custom_call.1} parent=11 // pred_region
          _
        $region20: #{tpu_custom_call.1} parent=11 // pred_fallthru
          _
      $region12: #{tpu_custom_call.1} parent=5 // pred_fallthru
        _
      %p604 = scmp.lt.s32.totalorder %s35, 4
      // Predicated region
      $region21: #{tpu_custom_call.1} parent=5 // pred_check
        %p605 = pneg %p604
      $region22: #{tpu_custom_call.1} parent=5 // pred_check_branch
        %607 = sbr.rel (%p605) target = $region24
      $region23: #{tpu_custom_call.1} parent=5 // pred_region
        // Predicated region
        $region25: #{tpu_custom_call.1} parent=23 // pred_check
          %p608 = pneg %p67
        $region26: #{tpu_custom_call.1} parent=23 // pred_check_branch
          %610 = sbr.rel (%p608) target = $region28
        $region27: #{tpu_custom_call.1} parent=23 // pred_region
          %s611 = sand.u32 %s57, 1
          %s612 = scalar_lea.sflag [#allocation4], %s611
          %s613 = sand.u32 %s57, 1
          %s614 = smul.addr %s613, 8
          %s615 = scalar_lea.vmem [#allocation3], %s614
          %s617 = ssub.s32 128, 128
          %618 = vsyncadd %s612, %s617
          %s619 = smul.addr %s42, 128
          %s620 = scalar_lea.hbm %s0, %s619
          %s622 = sshll.u32 %s615, 4
          %s623 = int_to_ptr.vmem [resolvable:$true] %s622
          %625 = dma.hbm_to_vmem [thread:$0]  %s620, 128, %s623, %s612
        $region28: #{tpu_custom_call.1} parent=23 // pred_fallthru
          _
        // Predicated region
        $region29: #{tpu_custom_call.1} parent=23 // pred_check
          %p626 = pneg %p93
        $region30: #{tpu_custom_call.1} parent=23 // pred_check_branch
          %628 = sbr.rel (%p626) target = $region32
        $region31: #{tpu_custom_call.1} parent=23 // pred_region
          %p629 = scmp.lt.s32.totalorder %s42, 1
          %s630 = scalar_select %p629, %s42, 1
          %s631 = scalar_lea.vmem %s1, %s630
        $region32: #{tpu_custom_call.1} parent=23 // pred_fallthru
          _
        // Predicated region
        $region33: #{tpu_custom_call.1} parent=23 // pred_check
          %p632 = pneg %p119
        $region34: #{tpu_custom_call.1} parent=23 // pred_check_branch
          %634 = sbr.rel (%p632) target = $region36
        $region35: #{tpu_custom_call.1} parent=23 // pred_region
          %p635 = scmp.lt.s32.totalorder %s43, 1
          %s636 = scalar_select %p635, %s43, 1
          %s637 = smul.addr %s636, 4
          %s638 = smul.addr %s637, 8
          %s639 = scalar_lea.vmem %s2, %s638
        $region36: #{tpu_custom_call.1} parent=23 // pred_fallthru
          _
        // Predicated region
        $region37: #{tpu_custom_call.1} parent=23 // pred_check
          %p640 = pneg %p145
        $region38: #{tpu_custom_call.1} parent=23 // pred_check_branch
          %642 = sbr.rel (%p640) target = $region40
        $region39: #{tpu_custom_call.1} parent=23 // pred_region
          %p643 = scmp.lt.s32.totalorder %s43, 1
          %s644 = scalar_select %p643, %s43, 1
          %s645 = smul.addr %s644, 4
          %s646 = smul.addr %s645, 8
          %s647 = scalar_lea.vmem %s3, %s646
        $region40: #{tpu_custom_call.1} parent=23 // pred_fallthru
          _
        // Predicated region
        $region41: #{tpu_custom_call.1} parent=23 // pred_check
          %p648 = pneg %p171
        $region42: #{tpu_custom_call.1} parent=23 // pred_check_branch
          %650 = sbr.rel (%p648) target = $region44
        $region43: #{tpu_custom_call.1} parent=23 // pred_region
          %p651 = scmp.lt.s32.totalorder %s43, 1
          %s652 = scalar_select %p651, %s43, 1
          %s653 = smul.addr %s652, 4
          %s654 = smul.addr %s653, 8
          %s655 = scalar_lea.vmem %s4, %s654
        $region44: #{tpu_custom_call.1} parent=23 // pred_fallthru
          _
        // Predicated region
        $region45: #{tpu_custom_call.1} parent=23 // pred_check
          %p656 = pneg %p197
        $region46: #{tpu_custom_call.1} parent=23 // pred_check_branch
          %658 = sbr.rel (%p656) target = $region48
        $region47: #{tpu_custom_call.1} parent=23 // pred_region
          %s659 = sand.u32 %s35, 1
          %s660 = scalar_lea.sflag [#allocation7], %s659
          %s661 = sand.u32 %s187, 1
          %s662 = smul.addr %s661, 32
          %s663 = scalar_lea.vmem [#allocation6], %s662
          %s665 = ssub.s32 512, 512
          %666 = vsyncadd %s660, %s665
          %s667 = smul.addr %s43, 4
          %s668 = smul.addr %s667, 128
          %s669 = scalar_lea.hbm %s5, %s668
          %s670 = sshll.u32 %s663, 4
          %s671 = int_to_ptr.vmem [resolvable:$true] %s670
          %676 = dma.hbm_to_vmem [thread:$0]  %s669, 512, %s671, %s660, 128, 128, 8
        $region48: #{tpu_custom_call.1} parent=23 // pred_fallthru
          _
        // Predicated region
        $region49: #{tpu_custom_call.1} parent=23 // pred_check
          %p677 = pneg %p223
        $region50: #{tpu_custom_call.1} parent=23 // pred_check_branch
          %679 = sbr.rel (%p677) target = $region52
        $region51: #{tpu_custom_call.1} parent=23 // pred_region
          %p680 = scmp.lt.s32.totalorder %s43, 1
          %s681 = scalar_select %p680, %s43, 1
          %s682 = scalar_lea.vmem %s6, %s681
        $region52: #{tpu_custom_call.1} parent=23 // pred_fallthru
          _
        // Predicated region
        $region53: #{tpu_custom_call.1} parent=23 // pred_check
          %p683 = pneg %p249
        $region54: #{tpu_custom_call.1} parent=23 // pred_check_branch
          %685 = sbr.rel (%p683) target = $region56
        $region55: #{tpu_custom_call.1} parent=23 // pred_region
          %p686 = scmp.lt.s32.totalorder %s43, 1
          %s687 = scalar_select %p686, %s43, 1
          %s688 = scalar_lea.vmem %s7, %s687
        $region56: #{tpu_custom_call.1} parent=23 // pred_fallthru
          _
        // Predicated region
        $region57: #{tpu_custom_call.1} parent=23 // pred_check
          %p689 = pneg %p275
        $region58: #{tpu_custom_call.1} parent=23 // pred_check_branch
          %691 = sbr.rel (%p689) target = $region60
        $region59: #{tpu_custom_call.1} parent=23 // pred_region
          %p692 = scmp.lt.s32.totalorder %s43, 1
          %s693 = scalar_select %p692, %s43, 1
          %s694 = scalar_lea.vmem %s8, %s693
        $region60: #{tpu_custom_call.1} parent=23 // pred_fallthru
          _
        // Predicated region
        $region61: #{tpu_custom_call.1} parent=23 // pred_check
          %p695 = pneg %p301
        $region62: #{tpu_custom_call.1} parent=23 // pred_check_branch
          %697 = sbr.rel (%p695) target = $region64
        $region63: #{tpu_custom_call.1} parent=23 // pred_region
          %p698 = scmp.lt.s32.totalorder %s43, 1
          %s699 = scalar_select %p698, %s43, 1
          %s700 = scalar_lea.vmem %s9, %s699
        $region64: #{tpu_custom_call.1} parent=23 // pred_fallthru
          _
        // Predicated region
        $region65: #{tpu_custom_call.1} parent=23 // pred_check
          %p701 = pneg %p327
        $region66: #{tpu_custom_call.1} parent=23 // pred_check_branch
          %703 = sbr.rel (%p701) target = $region68
        $region67: #{tpu_custom_call.1} parent=23 // pred_region
          %p704 = scmp.lt.s32.totalorder %s43, 1
          %s705 = scalar_select %p704, %s43, 1
          %s706 = scalar_lea.vmem %s10, %s705
        $region68: #{tpu_custom_call.1} parent=23 // pred_fallthru
          _
        // Predicated region
        $region69: #{tpu_custom_call.1} parent=23 // pred_check
          %p707 = pneg %p353
        $region70: #{tpu_custom_call.1} parent=23 // pred_check_branch
          %709 = sbr.rel (%p707) target = $region72
        $region71: #{tpu_custom_call.1} parent=23 // pred_region
          %p710 = scmp.lt.s32.totalorder %s43, 1
          %s711 = scalar_select %p710, %s43, 1
          %s712 = scalar_lea.vmem %s11, %s711
        $region72: #{tpu_custom_call.1} parent=23 // pred_fallthru
          _
        // Predicated region
        $region73: #{tpu_custom_call.1} parent=23 // pred_check
          %p713 = pneg %p379
        $region74: #{tpu_custom_call.1} parent=23 // pred_check_branch
          %715 = sbr.rel (%p713) target = $region76
        $region75: #{tpu_custom_call.1} parent=23 // pred_region
          %p716 = scmp.lt.s32.totalorder %s43, 1
          %s717 = scalar_select %p716, %s43, 1
          %s718 = scalar_lea.vmem %s12, %s717
        $region76: #{tpu_custom_call.1} parent=23 // pred_fallthru
          _
        // Predicated region
        $region77: #{tpu_custom_call.1} parent=23 // pred_check
          %p719 = pneg %p405
        $region78: #{tpu_custom_call.1} parent=23 // pred_check_branch
          %721 = sbr.rel (%p719) target = $region80
        $region79: #{tpu_custom_call.1} parent=23 // pred_region
          %p722 = scmp.lt.s32.totalorder %s43, 1
          %s723 = scalar_select %p722, %s43, 1
          %s724 = scalar_lea.vmem %s13, %s723
        $region80: #{tpu_custom_call.1} parent=23 // pred_fallthru
          _
        // Predicated region
        $region81: #{tpu_custom_call.1} parent=23 // pred_check
          %p725 = pneg %p431
        $region82: #{tpu_custom_call.1} parent=23 // pred_check_branch
          %727 = sbr.rel (%p725) target = $region84
        $region83: #{tpu_custom_call.1} parent=23 // pred_region
          %s728 = sand.u32 %s35, 1
          %s729 = scalar_lea.sflag [#allocation7], %s728
          %s730 = sand.u32 %s421, 1
          %s731 = smul.addr %s730, 32
          %s732 = scalar_lea.vmem [#allocation8], %s731
          %s734 = ssub.s32 512, 512
          %735 = vsyncadd %s729, %s734
          %s736 = smul.addr %s43, 4
          %s737 = smul.addr %s736, 128
          %s738 = scalar_lea.hbm %s14, %s737
          %s739 = sshll.u32 %s732, 4
          %s740 = int_to_ptr.vmem [resolvable:$true] %s739
          %745 = dma.hbm_to_vmem [thread:$0]  %s738, 512, %s740, %s729, 128, 128, 8
        $region84: #{tpu_custom_call.1} parent=23 // pred_fallthru
          _
        // Predicated region
        $region85: #{tpu_custom_call.1} parent=23 // pred_check
          %p746 = pneg %p457
        $region86: #{tpu_custom_call.1} parent=23 // pred_check_branch
          %748 = sbr.rel (%p746) target = $region88
        $region87: #{tpu_custom_call.1} parent=23 // pred_region
          %p749 = scmp.lt.s32.totalorder %s43, 1
          %s750 = scalar_select %p749, %s43, 1
          %s751 = scalar_lea.vmem %s15, %s750
        $region88: #{tpu_custom_call.1} parent=23 // pred_fallthru
          _
        // Predicated region
        $region89: #{tpu_custom_call.1} parent=23 // pred_check
          %p752 = pneg %p483
        $region90: #{tpu_custom_call.1} parent=23 // pred_check_branch
          %754 = sbr.rel (%p752) target = $region92
        $region91: #{tpu_custom_call.1} parent=23 // pred_region
          %p755 = scmp.lt.s32.totalorder %s43, 1
          %s756 = scalar_select %p755, %s43, 1
          %s757 = smul.addr %s756, 8
          %s758 = smul.addr %s757, 8
          %s759 = scalar_lea.vmem %s16, %s758
        $region92: #{tpu_custom_call.1} parent=23 // pred_fallthru
          _
        // Predicated region
        $region93: #{tpu_custom_call.1} parent=23 // pred_check
          %p760 = pneg %p509
        $region94: #{tpu_custom_call.1} parent=23 // pred_check_branch
          %762 = sbr.rel (%p760) target = $region96
        $region95: #{tpu_custom_call.1} parent=23 // pred_region
          %p763 = scmp.lt.s32.totalorder %s43, 1
          %s764 = scalar_select %p763, %s43, 1
          %s765 = scalar_lea.vmem %s17, %s764
        $region96: #{tpu_custom_call.1} parent=23 // pred_fallthru
          _
      $region24: #{tpu_custom_call.1} parent=5 // pred_fallthru
        _
      %p766 = scmp.le.s32.totalorder 1, %s35
      %p767 = scmp.lt.s32.totalorder %s35, 5
      %p768 = pnand %p766, %p767
      %p769 = pneg %p768
      // Predicated region
      $region97: #{tpu_custom_call.1} parent=5 // pred_check
        _
      $region98: #{tpu_custom_call.1} parent=5 // pred_check_branch
        %771 = sbr.rel (%p768) target = $region100
      $region99: #{tpu_custom_call.1} parent=5 // pred_region
        %s772 = ssub.s32 %s35, 1
        %s773 = sand.u32 %s60, 1
        %s774 = scalar_lea.sflag [#allocation4], %s773
        %s775 = sand.u32 %s60, 1
        %s776 = smul.addr %s775, 8
        %s777 = scalar_lea.vmem [#allocation3], %s776
        // Predicated region
        $region101: #{tpu_custom_call.1} parent=99 // pred_check
          %p778 = pneg %p73
        $region102: #{tpu_custom_call.1} parent=99 // pred_check_branch
          %780 = sbr.rel (%p778) target = $region104
        $region103: #{tpu_custom_call.1} parent=99 // pred_region
          %781 = dma.done %s774, 128
        $region104: #{tpu_custom_call.1} parent=99 // pred_fallthru
          _
        %s782 = sand.u32 %s40, 1
        %s783 = scalar_lea.sflag [#allocation7], %s782
        %s784 = sand.u32 %s190, 1
        %s785 = smul.addr %s784, 32
        %s786 = scalar_lea.vmem [#allocation6], %s785
        // Predicated region
        $region105: #{tpu_custom_call.1} parent=99 // pred_check
          %p787 = pneg %p203
        $region106: #{tpu_custom_call.1} parent=99 // pred_check_branch
          %789 = sbr.rel (%p787) target = $region108
        $region107: #{tpu_custom_call.1} parent=99 // pred_region
          %790 = dma.done %s783, 512
        $region108: #{tpu_custom_call.1} parent=99 // pred_fallthru
          _
        %s791 = sand.u32 %s40, 1
        %s792 = scalar_lea.sflag [#allocation7], %s791
        %s793 = sand.u32 %s424, 1
        %s794 = smul.addr %s793, 32
        %s795 = scalar_lea.vmem [#allocation8], %s794
        // Predicated region
        $region109: #{tpu_custom_call.1} parent=99 // pred_check
          %p796 = pneg %p437
        $region110: #{tpu_custom_call.1} parent=99 // pred_check_branch
          %798 = sbr.rel (%p796) target = $region112
        $region111: #{tpu_custom_call.1} parent=99 // pred_region
          %799 = dma.done %s792, 512
        $region112: #{tpu_custom_call.1} parent=99 // pred_fallthru
          _
        %s800 = sand.u32 %s60, 1
        %s801 = scalar_lea.sflag [#allocation4], %s800
        %s802 = sand.u32 %s60, 1
        %s803 = smul.addr %s802, 8
        %s804 = scalar_lea.vmem [#allocation3], %s803
        %p805 = pneg %p73
        %p806 = pneg %p70
        %p807 = scmp.lt.s32.totalorder %s44, 1
        %s808 = scalar_select %p807, %s44, 1
        %s809 = scalar_lea.vmem %s1, %s808
        %p810 = pneg %p99
        %p811 = pneg %p96
        %p812 = scmp.lt.s32.totalorder %s45, 1
        %s813 = scalar_select %p812, %s45, 1
        %s814 = smul.addr %s813, 4
        %s815 = smul.addr %s814, 8
        %s816 = scalar_lea.vmem %s2, %s815
        %p817 = pneg %p125
        %p818 = pneg %p122
        %p819 = scmp.lt.s32.totalorder %s45, 1
        %s820 = scalar_select %p819, %s45, 1
        %s821 = smul.addr %s820, 4
        %s822 = smul.addr %s821, 8
        %s823 = scalar_lea.vmem %s3, %s822
        %p824 = pneg %p151
        %p825 = pneg %p148
        %p826 = scmp.lt.s32.totalorder %s45, 1
        %s827 = scalar_select %p826, %s45, 1
        %s828 = smul.addr %s827, 4
        %s829 = smul.addr %s828, 8
        %s830 = scalar_lea.vmem %s4, %s829
        %p831 = pneg %p177
        %p832 = pneg %p174
        %s833 = sand.u32 %s40, 1
        %s834 = scalar_lea.sflag [#allocation7], %s833
        %s835 = sand.u32 %s190, 1
        %s836 = smul.addr %s835, 32
        %s837 = scalar_lea.vmem [#allocation6], %s836
        %p838 = pneg %p203
        %p839 = pneg %p200
        %p840 = scmp.lt.s32.totalorder %s45, 1
        %s841 = scalar_select %p840, %s45, 1
        %s842 = scalar_lea.vmem %s6, %s841
        %p843 = pneg %p229
        %p844 = pneg %p226
        %p845 = scmp.lt.s32.totalorder %s45, 1
        %s846 = scalar_select %p845, %s45, 1
        %s847 = scalar_lea.vmem %s7, %s846
        %p848 = pneg %p255
        %p849 = pneg %p252
        %p850 = scmp.lt.s32.totalorder %s45, 1
        %s851 = scalar_select %p850, %s45, 1
        %s852 = scalar_lea.vmem %s8, %s851
        %p853 = pneg %p281
        %p854 = pneg %p278
        %p855 = scmp.lt.s32.totalorder %s45, 1
        %s856 = scalar_select %p855, %s45, 1
        %s857 = scalar_lea.vmem %s9, %s856
        %p858 = pneg %p307
        %p859 = pneg %p304
        %p860 = scmp.lt.s32.totalorder %s45, 1
        %s861 = scalar_select %p860, %s45, 1
        %s862 = scalar_lea.vmem %s10, %s861
        %p863 = pneg %p333
        %p864 = pneg %p330
        %p865 = scmp.lt.s32.totalorder %s45, 1
        %s866 = scalar_select %p865, %s45, 1
        %s867 = scalar_lea.vmem %s11, %s866
        %p868 = pneg %p359
        %p869 = pneg %p356
        %p870 = scmp.lt.s32.totalorder %s45, 1
        %s871 = scalar_select %p870, %s45, 1
        %s872 = scalar_lea.vmem %s12, %s871
        %p873 = pneg %p385
        %p874 = pneg %p382
        %p875 = scmp.lt.s32.totalorder %s45, 1
        %s876 = scalar_select %p875, %s45, 1
        %s877 = scalar_lea.vmem %s13, %s876
        %p878 = pneg %p411
        %p879 = pneg %p408
        %s880 = sand.u32 %s40, 1
        %s881 = scalar_lea.sflag [#allocation7], %s880
        %s882 = sand.u32 %s424, 1
        %s883 = smul.addr %s882, 32
        %s884 = scalar_lea.vmem [#allocation8], %s883
        %p885 = pneg %p437
        %p886 = pneg %p434
        %p887 = scmp.lt.s32.totalorder %s45, 1
        %s888 = scalar_select %p887, %s45, 1
        %s889 = scalar_lea.vmem %s15, %s888
        %p890 = pneg %p463
        %p891 = pneg %p460
        %p892 = scmp.lt.s32.totalorder %s45, 1
        %s893 = scalar_select %p892, %s45, 1
        %s894 = smul.addr %s893, 8
        %s895 = smul.addr %s894, 8
        %s896 = scalar_lea.vmem %s16, %s895
        %p897 = pneg %p489
        %p898 = pneg %p486
        %p899 = scmp.lt.s32.totalorder %s45, 1
        %s900 = scalar_select %p899, %s45, 1
        %s901 = scalar_lea.vmem %s17, %s900
        %p902 = pneg %p515
        %p903 = pneg %p512
        %p904 = pneg %p536
        %p905 = pneg %p533
        %p906 = pneg %p557
        %p907 = pneg %p554
        %p908 = pneg %p583
        %p909 = pneg %p580
        %s910 = sand.u32 %s570, 1
        %s911 = scalar_lea.sflag [#allocation5], %s910
        %s912 = sand.u32 %s570, 1
        %s913 = smul.addr %s912, 8
        %s914 = scalar_lea.vmem [#allocation9], %s913
        %p915 = scmp.lt.s32.totalorder %s44, 1
        %s916 = scalar_select %p915, %s44, 1
        %s917 = scalar_lea.vmem %s1, %s916
        %p918 = scmp.lt.s32.totalorder %s45, 1
        %s919 = scalar_select %p918, %s45, 1
        %s920 = smul.addr %s919, 4
        %s921 = smul.addr %s920, 8
        %s922 = scalar_lea.vmem %s2, %s921
        %p923 = scmp.lt.s32.totalorder %s45, 1
        %s924 = scalar_select %p923, %s45, 1
        %s925 = smul.addr %s924, 4
        %s926 = smul.addr %s925, 8
        %s927 = scalar_lea.vmem %s3, %s926
        %p928 = scmp.lt.s32.totalorder %s45, 1
        %s929 = scalar_select %p928, %s45, 1
        %s930 = smul.addr %s929, 4
        %s931 = smul.addr %s930, 8
        %s932 = scalar_lea.vmem %s4, %s931
        %p933 = scmp.lt.s32.totalorder %s45, 1
        %s934 = scalar_select %p933, %s45, 1
        %s935 = scalar_lea.vmem %s6, %s934
        %p936 = scmp.lt.s32.totalorder %s45, 1
        %s937 = scalar_select %p936, %s45, 1
        %s938 = scalar_lea.vmem %s7, %s937
        %p939 = scmp.lt.s32.totalorder %s45, 1
        %s940 = scalar_select %p939, %s45, 1
        %s941 = scalar_lea.vmem %s8, %s940
        %p942 = scmp.lt.s32.totalorder %s45, 1
        %s943 = scalar_select %p942, %s45, 1
        %s944 = scalar_lea.vmem %s9, %s943
        %p945 = scmp.lt.s32.totalorder %s45, 1
        %s946 = scalar_select %p945, %s45, 1
        %s947 = scalar_lea.vmem %s10, %s946
        %p948 = scmp.lt.s32.totalorder %s45, 1
        %s949 = scalar_select %p948, %s45, 1
        %s950 = scalar_lea.vmem %s11, %s949
        %p951 = scmp.lt.s32.totalorder %s45, 1
        %s952 = scalar_select %p951, %s45, 1
        %s953 = scalar_lea.vmem %s12, %s952
        %p954 = scmp.lt.s32.totalorder %s45, 1
        %s955 = scalar_select %p954, %s45, 1
        %s956 = scalar_lea.vmem %s13, %s955
        %p957 = scmp.lt.s32.totalorder %s45, 1
        %s958 = scalar_select %p957, %s45, 1
        %s959 = scalar_lea.vmem %s15, %s958
        %p960 = scmp.lt.s32.totalorder %s45, 1
        %s961 = scalar_select %p960, %s45, 1
        %s962 = smul.addr %s961, 8
        %s963 = smul.addr %s962, 8
        %s964 = scalar_lea.vmem %s16, %s963
        %p965 = scmp.lt.s32.totalorder %s45, 1
        %s966 = scalar_select %p965, %s45, 1
        %s967 = scalar_lea.vmem %s17, %s966
        %p968 = scmp.eq.s32.totalorder %s45, 0
        // Predicated region
        $region113: #{tpu_custom_call.1} parent=99 // pred_check
          %p969 = pneg %p968
        $region114: #{tpu_custom_call.1} parent=99 // pred_check_branch
          %971 = sbr.rel (%p969) target = $region116
        $region115: #{tpu_custom_call.1} parent=99 // pred_region
          %v972 = vld [vmem:[%s777] sm:$0xff]
          %vm973 = vcmask 261120
          %974 = vst.msk [vmem:[#allocation2] sm:$0xff] %vm973, %v972
        $region116: #{tpu_custom_call.1} parent=99 // pred_fallthru
          _
        %v975 = vld [vmem:[#allocation2] sm:$0xff]
        %v976 = vld [vmem:[%s922] sm:$0xff]
        %v977 = vld [vmem:[%s922 + $0x8] sm:$0xff]
        %v978 = vld [vmem:[%s922 + $0x10] sm:$0xff]
        %v979 = vld [vmem:[%s922 + $0x18] sm:$0xff]
        %v980 = vld [vmem:[%s927] sm:$0xff]
        %v981 = vld [vmem:[%s927 + $0x8] sm:$0xff]
        %v982 = vld [vmem:[%s927 + $0x10] sm:$0xff]
        %v983 = vld [vmem:[%s927 + $0x18] sm:$0xff]
        %v984 = vld [vmem:[%s932] sm:$0xff]
        %v985 = vld [vmem:[%s932 + $0x8] sm:$0xff]
        %v986 = vld [vmem:[%s932 + $0x10] sm:$0xff]
        %v987 = vld [vmem:[%s932 + $0x18] sm:$0xff]
        %v988 = vld [vmem:[%s786] sm:$0xff]
        %v989 = vld [vmem:[%s786 + $0x8] sm:$0xff]
        %v990 = vld [vmem:[%s786 + $0x10] sm:$0xff]
        %v991 = vld [vmem:[%s786 + $0x18] sm:$0xff]
        %v992 = vld [vmem:[%s935] sm:$0x1]
        %v993 = vld [vmem:[%s938] sm:$0x1]
        %v994 = vld [vmem:[%s941] sm:$0x1]
        %v995 = vld [vmem:[%s944] sm:$0x1]
        %v996 = vld [vmem:[%s947] sm:$0x1]
        %v997 = vld [vmem:[%s950] sm:$0x1]
        %v998 = vld [vmem:[%s953] sm:$0x1]
        %v999 = vld [vmem:[%s956] sm:$0x1]
        %v1000 = vld [vmem:[%s795] sm:$0xff]
        %v1001 = vld [vmem:[%s795 + $0x8] sm:$0xff]
        %v1002 = vld [vmem:[%s795 + $0x10] sm:$0xff]
        %v1003 = vld [vmem:[%s795 + $0x18] sm:$0xff]
        %v1004 = vld [vmem:[%s959] sm:$0x1]
        %v1005 = vld [vmem:[%s964] sm:$0xff]
        %v1006 = vld [vmem:[%s964 + $0x8] sm:$0xff]
        %v1007 = vld [vmem:[%s964 + $0x10] sm:$0xff]
        %v1008 = vld [vmem:[%s964 + $0x18] sm:$0xff]
        %v1009 = vld [vmem:[%s964 + $0x20] sm:$0xff]
        %v1010 = vld [vmem:[%s964 + $0x28] sm:$0xff]
        %v1011 = vld [vmem:[%s964 + $0x30] sm:$0xff]
        %v1012 = vld [vmem:[%s964 + $0x38] sm:$0xff]
        %v1013 = vld [vmem:[%s967] sm:$0x1]
        %v1014 = vld [vmem:[%s917] sm:$0x1]
        %vm1015 = vcmp.eq.s32.totalorder %v1014, 0
        %vm1016 = vcmask 261120
        %v1017 = vsel %vm1016, %v975, 0.0
        %1018 = vadd.xlane.f32.xlu0 %v1017
        %v1019 = vpop.xlane.xlu0 %1018
        %v1020 = vrcp.pop 32.0
        %v1021 = vmul.f32 %v1019, %v1020
        %v1022 = vsub.f32 %v975, %v1021
        %v1023 = vmul.f32 %v1022, %v1022
        %v1024 = vsel %vm1016, %v1023, 0.0
        %1025 = vadd.xlane.f32.xlu0 %v1024
        %v1026 = vpop.xlane.xlu0 %1025
        %v1027 = vmul.f32 %v1026, 0.032258064
        %v1028 = vrsqrt.pop %v1027
        %v1029 = vmul.f32 %v1027, %v1028
        %vm1030 = vcmp.eq.f32.partialorder %v1027, inf
        %v1031 = vsel %vm1030, %v1027, %v1029
        %vm1032 = vcmp.eq.f32.partialorder %v1027, 0.0
        %v1033 = vand.u32 %v1027, 2147483648
        %v1034 = vsel %vm1032, %v1033, %v1031
        %v1035 = vadd.f32 %v1034, 1e-06
        %v1036 = vrcp.pop %v1035
        %v1038 = vlaneseq
        %v1039 = vshrl.u32 %v1038, 7
        %v1040 = vsub.s32 0, %v1039
        %v1041 = vrot.slane %v996, %v1040
        %v1043 = vmul.f32 %v1041, %v1022
        %v1044 = vmul.f32 %v1043, %v1036
        %v1046 = vlaneseq
        %v1047 = vshrl.u32 %v1046, 7
        %v1048 = vsub.s32 0, %v1047
        %v1049 = vrot.slane %v997, %v1048
        %v1051 = vadd.f32 %v1044, %v1049
        %v1053 = vlaneseq
        %v1054 = vshrl.u32 %v1053, 7
        %v1055 = vsub.s32 0, %v1054
        %v1056 = vrot.slane %v992, %v1055
        %v1059 = vsel %vm1016, %v1051, 0
        %1061 = vmatprep.subr.mxu0 0.0
        %1062 = vmatpush1.msra.mxu0 %v976
        %1063 = vmatprep.subr.mxu0 0.0
        %1064 = vmatpush1.msra.mxu0 %v977
        %1065 = vmatprep.subr.mxu0 0.0
        %1066 = vmatpush1.msra.mxu0 %v978
        %1067 = vmatprep.subr.mxu0 0.0
        %1068 = vmatpush1.msra.mxu0 %v979
        %1069 = vmatprep.subr.mxu0 0.0
        %1070 = vmatpush1.msra.mxu0 0.0
        %1071 = vmatprep.subr.mxu0 0.0
        %1072 = vmatpush1.msra.mxu0 0.0
        %1073 = vmatprep.subr.mxu0 0.0
        %1074 = vmatpush1.msra.mxu0 0.0
        %1075 = vmatprep.subr.mxu0 0.0
        %1076 = vmatpush1.msra.mxu0 0.0
        %1077 = vmatprep.subr.mxu0 0.0
        %1078 = vmatpush1.msra.mxu0 0.0
        %1079 = vmatprep.subr.mxu0 0.0
        %1080 = vmatpush1.msra.mxu0 0.0
        %1081 = vmatprep.subr.mxu0 0.0
        %1082 = vmatpush1.msra.mxu0 0.0
        %1083 = vmatprep.subr.mxu0 0.0
        %1084 = vmatpush1.msra.mxu0 0.0
        %1085 = vmatprep.subr.mxu0 0.0
        %1086 = vmatpush1.msra.mxu0 0.0
        %1087 = vmatprep.subr.mxu0 0.0
        %1088 = vmatpush1.msra.mxu0 0.0
        %1089 = vmatprep.subr.mxu0 0.0
        %1090 = vmatpush1.msra.mxu0 0.0
        %1091 = vmatprep.subr.mxu0 0.0
        %1092 = vmatpush1.msra.mxu0 0.0
        %1093 = vmatprep.subr.mxu0 0.0
        %1094 = vmatpush1.msra.mxu0 0.0
        %1095 = vmatprep.subr.mxu0 0.0
        %1096 = vmatpush1.msra.mxu0 0.0
        %1097 = vmatprep.subr.mxu0 0.0
        %1098 = vmatpush1.msra.mxu0 0.0
        %1099 = vmatprep.subr.mxu0 0.0
        %1100 = vmatpush1.msra.mxu0 0.0
        %1101 = vmatprep.subr.mxu0 0.0
        %1102 = vmatpush1.msra.mxu0 0.0
        %1103 = vmatprep.subr.mxu0 0.0
        %1104 = vmatpush1.msra.mxu0 0.0
        %1105 = vmatprep.subr.mxu0 0.0
        %1106 = vmatpush1.msra.mxu0 0.0
        %1107 = vmatprep.subr.mxu0 0.0
        %1108 = vmatpush1.msra.mxu0 0.0
        %1109 = vmatprep.subr.mxu0 0.0
        %1110 = vmatpush1.msra.mxu0 0.0
        %1111 = vmatprep.subr.mxu0 0.0
        %1112 = vmatpush1.msra.mxu0 0.0
        %1113 = vmatprep.subr.mxu0 0.0
        %1114 = vmatpush1.msra.mxu0 0.0
        %1115 = vmatprep.subr.mxu0 0.0
        %1116 = vmatpush1.msra.mxu0 0.0
        %1117 = vmatprep.subr.mxu0 0.0
        %1118 = vmatpush1.msra.mxu0 0.0
        %1119 = vmatprep.subr.mxu0 0.0
        %1120 = vmatpush1.msra.mxu0 0.0
        %1121 = vmatprep.subr.mxu0 0.0
        %1122 = vmatpush1.msra.mxu0 0.0
        %1123 = vmatprep.subr.mxu0 0.0
        %1124 = vmatpush1.msra.mxu0 0.0
        %1125 = vmatprep.mubr.f32.mxu0 0.0
        %1126 = vmatmul.mubr.f32.gmra.mrb[0].mxu0 %v1059
        %v1127 = vpop.f32.mrb[0].mxu0
        %v1128 = vadd.f32 %v1056, %v1127
        %v1129 = vpop.f32.mrb[0].mxu0
        %1130 = vdwg.mxu0
        %v1132 = vlaneseq
        %v1133 = vshrl.u32 %v1132, 7
        %v1134 = vsub.s32 0, %v1133
        %v1135 = vrot.slane %v993, %v1134
        %1137 = vmatprep.subr.mxu0 0.0
        %1138 = vmatpush1.msra.mxu0 %v980
        %1139 = vmatprep.subr.mxu0 0.0
        %1140 = vmatpush1.msra.mxu0 %v981
        %1141 = vmatprep.subr.mxu0 0.0
        %1142 = vmatpush1.msra.mxu0 %v982
        %1143 = vmatprep.subr.mxu0 0.0
        %1144 = vmatpush1.msra.mxu0 %v983
        %1145 = vmatprep.subr.mxu0 0.0
        %1146 = vmatpush1.msra.mxu0 0.0
        %1147 = vmatprep.subr.mxu0 0.0
        %1148 = vmatpush1.msra.mxu0 0.0
        %1149 = vmatprep.subr.mxu0 0.0
        %1150 = vmatpush1.msra.mxu0 0.0
        %1151 = vmatprep.subr.mxu0 0.0
        %1152 = vmatpush1.msra.mxu0 0.0
        %1153 = vmatprep.subr.mxu0 0.0
        %1154 = vmatpush1.msra.mxu0 0.0
        %1155 = vmatprep.subr.mxu0 0.0
        %1156 = vmatpush1.msra.mxu0 0.0
        %1157 = vmatprep.subr.mxu0 0.0
        %1158 = vmatpush1.msra.mxu0 0.0
        %1159 = vmatprep.subr.mxu0 0.0
        %1160 = vmatpush1.msra.mxu0 0.0
        %1161 = vmatprep.subr.mxu0 0.0
        %1162 = vmatpush1.msra.mxu0 0.0
        %1163 = vmatprep.subr.mxu0 0.0
        %1164 = vmatpush1.msra.mxu0 0.0
        %1165 = vmatprep.subr.mxu0 0.0
        %1166 = vmatpush1.msra.mxu0 0.0
        %1167 = vmatprep.subr.mxu0 0.0
        %1168 = vmatpush1.msra.mxu0 0.0
        %1169 = vmatprep.subr.mxu0 0.0
        %1170 = vmatpush1.msra.mxu0 0.0
        %1171 = vmatprep.subr.mxu0 0.0
        %1172 = vmatpush1.msra.mxu0 0.0
        %1173 = vmatprep.subr.mxu0 0.0
        %1174 = vmatpush1.msra.mxu0 0.0
        %1175 = vmatprep.subr.mxu0 0.0
        %1176 = vmatpush1.msra.mxu0 0.0
        %1177 = vmatprep.subr.mxu0 0.0
        %1178 = vmatpush1.msra.mxu0 0.0
        %1179 = vmatprep.subr.mxu0 0.0
        %1180 = vmatpush1.msra.mxu0 0.0
        %1181 = vmatprep.subr.mxu0 0.0
        %1182 = vmatpush1.msra.mxu0 0.0
        %1183 = vmatprep.subr.mxu0 0.0
        %1184 = vmatpush1.msra.mxu0 0.0
        %1185 = vmatprep.subr.mxu0 0.0
        %1186 = vmatpush1.msra.mxu0 0.0
        %1187 = vmatprep.subr.mxu0 0.0
        %1188 = vmatpush1.msra.mxu0 0.0
        %1189 = vmatprep.subr.mxu0 0.0
        %1190 = vmatpush1.msra.mxu0 0.0
        %1191 = vmatprep.subr.mxu0 0.0
        %1192 = vmatpush1.msra.mxu0 0.0
        %1193 = vmatprep.subr.mxu0 0.0
        %1194 = vmatpush1.msra.mxu0 0.0
        %1195 = vmatprep.subr.mxu0 0.0
        %1196 = vmatpush1.msra.mxu0 0.0
        %1197 = vmatprep.subr.mxu0 0.0
        %1198 = vmatpush1.msra.mxu0 0.0
        %1199 = vmatprep.subr.mxu0 0.0
        %1200 = vmatpush1.msra.mxu0 0.0
        %1201 = vmatprep.mubr.f32.mxu0 0.0
        %1202 = vmatmul.mubr.f32.gmra.mrb[0].mxu0 %v1059
        %v1203 = vpop.f32.mrb[0].mxu0
        %v1204 = vadd.f32 %v1135, %v1203
        %v1205 = vpop.f32.mrb[0].mxu0
        %1206 = vdwg.mxu0
        %v1208 = vlaneseq
        %v1209 = vshrl.u32 %v1208, 7
        %v1210 = vsub.s32 0, %v1209
        %v1211 = vrot.slane %v994, %v1210
        %1213 = vmatprep.subr.mxu0 0.0
        %1214 = vmatpush1.msra.mxu0 %v984
        %1215 = vmatprep.subr.mxu0 0.0
        %1216 = vmatpush1.msra.mxu0 %v985
        %1217 = vmatprep.subr.mxu0 0.0
        %1218 = vmatpush1.msra.mxu0 %v986
        %1219 = vmatprep.subr.mxu0 0.0
        %1220 = vmatpush1.msra.mxu0 %v987
        %1221 = vmatprep.subr.mxu0 0.0
        %1222 = vmatpush1.msra.mxu0 0.0
        %1223 = vmatprep.subr.mxu0 0.0
        %1224 = vmatpush1.msra.mxu0 0.0
        %1225 = vmatprep.subr.mxu0 0.0
        %1226 = vmatpush1.msra.mxu0 0.0
        %1227 = vmatprep.subr.mxu0 0.0
        %1228 = vmatpush1.msra.mxu0 0.0
        %1229 = vmatprep.subr.mxu0 0.0
        %1230 = vmatpush1.msra.mxu0 0.0
        %1231 = vmatprep.subr.mxu0 0.0
        %1232 = vmatpush1.msra.mxu0 0.0
        %1233 = vmatprep.subr.mxu0 0.0
        %1234 = vmatpush1.msra.mxu0 0.0
        %1235 = vmatprep.subr.mxu0 0.0
        %1236 = vmatpush1.msra.mxu0 0.0
        %1237 = vmatprep.subr.mxu0 0.0
        %1238 = vmatpush1.msra.mxu0 0.0
        %1239 = vmatprep.subr.mxu0 0.0
        %1240 = vmatpush1.msra.mxu0 0.0
        %1241 = vmatprep.subr.mxu0 0.0
        %1242 = vmatpush1.msra.mxu0 0.0
        %1243 = vmatprep.subr.mxu0 0.0
        %1244 = vmatpush1.msra.mxu0 0.0
        %1245 = vmatprep.subr.mxu0 0.0
        %1246 = vmatpush1.msra.mxu0 0.0
        %1247 = vmatprep.subr.mxu0 0.0
        %1248 = vmatpush1.msra.mxu0 0.0
        %1249 = vmatprep.subr.mxu0 0.0
        %1250 = vmatpush1.msra.mxu0 0.0
        %1251 = vmatprep.subr.mxu0 0.0
        %1252 = vmatpush1.msra.mxu0 0.0
        %1253 = vmatprep.subr.mxu0 0.0
        %1254 = vmatpush1.msra.mxu0 0.0
        %1255 = vmatprep.subr.mxu0 0.0
        %1256 = vmatpush1.msra.mxu0 0.0
        %1257 = vmatprep.subr.mxu0 0.0
        %1258 = vmatpush1.msra.mxu0 0.0
        %1259 = vmatprep.subr.mxu0 0.0
        %1260 = vmatpush1.msra.mxu0 0.0
        %1261 = vmatprep.subr.mxu0 0.0
        %1262 = vmatpush1.msra.mxu0 0.0
        %1263 = vmatprep.subr.mxu0 0.0
        %1264 = vmatpush1.msra.mxu0 0.0
        %1265 = vmatprep.subr.mxu0 0.0
        %1266 = vmatpush1.msra.mxu0 0.0
        %1267 = vmatprep.subr.mxu0 0.0
        %1268 = vmatpush1.msra.mxu0 0.0
        %1269 = vmatprep.subr.mxu0 0.0
        %1270 = vmatpush1.msra.mxu0 0.0
        %1271 = vmatprep.subr.mxu0 0.0
        %1272 = vmatpush1.msra.mxu0 0.0
        %1273 = vmatprep.subr.mxu0 0.0
        %1274 = vmatpush1.msra.mxu0 0.0
        %1275 = vmatprep.subr.mxu0 0.0
        %1276 = vmatpush1.msra.mxu0 0.0
        %1277 = vmatprep.mubr.f32.mxu0 0.0
        %1278 = vmatmul.mubr.f32.gmra.mrb[0].mxu0 %v1059
        %v1279 = vpop.f32.mrb[0].mxu0
        %v1280 = vadd.f32 %v1211, %v1279
        %v1281 = vpop.f32.mrb[0].mxu0
        %1282 = vdwg.mxu0
        %1284 = vrot.lane.b32.xlu0 %v1128, 120
        %v1285 = vpop.permute.xlu0 %1284
        %1286 = vrot.lane.b32.xlu0 %v1128, 112
        %v1287 = vpop.permute.xlu0 %1286
        %1288 = vrot.lane.b32.xlu0 %v1128, 104
        %v1289 = vpop.permute.xlu0 %1288
        %1291 = vrot.lane.b32.xlu0 %v1204, 120
        %v1292 = vpop.permute.xlu0 %1291
        %1293 = vrot.lane.b32.xlu0 %v1204, 112
        %v1294 = vpop.permute.xlu0 %1293
        %1295 = vrot.lane.b32.xlu0 %v1204, 104
        %v1296 = vpop.permute.xlu0 %1295
        %1298 = vrot.lane.b32.xlu0 %v1280, 120
        %v1299 = vpop.permute.xlu0 %1298
        %1301 = vrot.lane.b32.xlu0 %v1280, 112
        %v1302 = vpop.permute.xlu0 %1301
        %1304 = vrot.lane.b32.xlu0 %v1280, 104
        %v1305 = vpop.permute.xlu0 %1304
        %vm1307 = vcmask 64512
        %v1308 = vsel %vm1307, %v1128, 0
        %v1310 = vsel %vm1307, %v1204, 0
        %1312 = vmatprep.subr.mxu0 0.0
        %1313 = vmatpush1.xpose.msra.mxu0 %v1310
        %1314 = vmatprep.subr.mxu0 0.0
        %1315 = vmatpush1.xpose.msra.mxu0 0.0
        %1316 = vmatprep.subr.mxu0 0.0
        %1317 = vmatpush1.xpose.msra.mxu0 0.0
        %1318 = vmatprep.subr.mxu0 0.0
        %1319 = vmatpush1.xpose.msra.mxu0 0.0
        %1320 = vmatprep.subr.mxu0 0.0
        %1321 = vmatpush1.xpose.msra.mxu0 0.0
        %1322 = vmatprep.subr.mxu0 0.0
        %1323 = vmatpush1.xpose.msra.mxu0 0.0
        %1324 = vmatprep.subr.mxu0 0.0
        %1325 = vmatpush1.xpose.msra.mxu0 0.0
        %1326 = vmatprep.subr.mxu0 0.0
        %1327 = vmatpush1.xpose.msra.mxu0 0.0
        %1328 = vmatprep.subr.mxu0 0.0
        %1329 = vmatpush1.xpose.msra.mxu0 0.0
        %1330 = vmatprep.subr.mxu0 0.0
        %1331 = vmatpush1.xpose.msra.mxu0 0.0
        %1332 = vmatprep.subr.mxu0 0.0
        %1333 = vmatpush1.xpose.msra.mxu0 0.0
        %1334 = vmatprep.subr.mxu0 0.0
        %1335 = vmatpush1.xpose.msra.mxu0 0.0
        %1336 = vmatprep.subr.mxu0 0.0
        %1337 = vmatpush1.xpose.msra.mxu0 0.0
        %1338 = vmatprep.subr.mxu0 0.0
        %1339 = vmatpush1.xpose.msra.mxu0 0.0
        %1340 = vmatprep.subr.mxu0 0.0
        %1341 = vmatpush1.xpose.msra.mxu0 0.0
        %1342 = vmatprep.subr.mxu0 0.0
        %1343 = vmatpush1.xpose.msra.mxu0 0.0
        %1344 = vmatprep.subr.mxu0 0.0
        %1345 = vmatpush1.xpose.msra.mxu0 0.0
        %1346 = vmatprep.subr.mxu0 0.0
        %1347 = vmatpush1.xpose.msra.mxu0 0.0
        %1348 = vmatprep.subr.mxu0 0.0
        %1349 = vmatpush1.xpose.msra.mxu0 0.0
        %1350 = vmatprep.subr.mxu0 0.0
        %1351 = vmatpush1.xpose.msra.mxu0 0.0
        %1352 = vmatprep.subr.mxu0 0.0
        %1353 = vmatpush1.xpose.msra.mxu0 0.0
        %1354 = vmatprep.subr.mxu0 0.0
        %1355 = vmatpush1.xpose.msra.mxu0 0.0
        %1356 = vmatprep.subr.mxu0 0.0
        %1357 = vmatpush1.xpose.msra.mxu0 0.0
        %1358 = vmatprep.subr.mxu0 0.0
        %1359 = vmatpush1.xpose.msra.mxu0 0.0
        %1360 = vmatprep.subr.mxu0 0.0
        %1361 = vmatpush1.xpose.msra.mxu0 0.0
        %1362 = vmatprep.subr.mxu0 0.0
        %1363 = vmatpush1.xpose.msra.mxu0 0.0
        %1364 = vmatprep.subr.mxu0 0.0
        %1365 = vmatpush1.xpose.msra.mxu0 0.0
        %1366 = vmatprep.subr.mxu0 0.0
        %1367 = vmatpush1.xpose.msra.mxu0 0.0
        %1368 = vmatprep.subr.mxu0 0.0
        %1369 = vmatpush1.xpose.msra.mxu0 0.0
        %1370 = vmatprep.subr.mxu0 0.0
        %1371 = vmatpush1.xpose.msra.mxu0 0.0
        %1372 = vmatprep.subr.mxu0 0.0
        %1373 = vmatpush1.xpose.msra.mxu0 0.0
        %1374 = vmatprep.subr.mxu0 0.0
        %1375 = vmatpush1.xpose.msra.mxu0 0.0
        %1376 = vmatprep.mubr.f32.mxu0 0.0
        %1377 = vmatmul.mubr.f32.gmra.mrb[0].mxu0 %v1308
        %v1378 = vpop.f32.mrb[0].mxu0
        %v1379 = vadd.f32 0.0, %v1378
        %v1380 = vpop.f32.mrb[0].mxu0
        %1381 = vdwg.mxu0
        %v1382 = vsel %vm1307, %v1285, 0
        %v1384 = vsel %vm1307, %v1292, 0
        %1386 = vmatprep.subr.mxu0 0.0
        %1387 = vmatpush1.xpose.msra.mxu0 %v1384
        %1388 = vmatprep.subr.mxu0 0.0
        %1389 = vmatpush1.xpose.msra.mxu0 0.0
        %1390 = vmatprep.subr.mxu0 0.0
        %1391 = vmatpush1.xpose.msra.mxu0 0.0
        %1392 = vmatprep.subr.mxu0 0.0
        %1393 = vmatpush1.xpose.msra.mxu0 0.0
        %1394 = vmatprep.subr.mxu0 0.0
        %1395 = vmatpush1.xpose.msra.mxu0 0.0
        %1396 = vmatprep.subr.mxu0 0.0
        %1397 = vmatpush1.xpose.msra.mxu0 0.0
        %1398 = vmatprep.subr.mxu0 0.0
        %1399 = vmatpush1.xpose.msra.mxu0 0.0
        %1400 = vmatprep.subr.mxu0 0.0
        %1401 = vmatpush1.xpose.msra.mxu0 0.0
        %1402 = vmatprep.subr.mxu0 0.0
        %1403 = vmatpush1.xpose.msra.mxu0 0.0
        %1404 = vmatprep.subr.mxu0 0.0
        %1405 = vmatpush1.xpose.msra.mxu0 0.0
        %1406 = vmatprep.subr.mxu0 0.0
        %1407 = vmatpush1.xpose.msra.mxu0 0.0
        %1408 = vmatprep.subr.mxu0 0.0
        %1409 = vmatpush1.xpose.msra.mxu0 0.0
        %1410 = vmatprep.subr.mxu0 0.0
        %1411 = vmatpush1.xpose.msra.mxu0 0.0
        %1412 = vmatprep.subr.mxu0 0.0
        %1413 = vmatpush1.xpose.msra.mxu0 0.0
        %1414 = vmatprep.subr.mxu0 0.0
        %1415 = vmatpush1.xpose.msra.mxu0 0.0
        %1416 = vmatprep.subr.mxu0 0.0
        %1417 = vmatpush1.xpose.msra.mxu0 0.0
        %1418 = vmatprep.subr.mxu0 0.0
        %1419 = vmatpush1.xpose.msra.mxu0 0.0
        %1420 = vmatprep.subr.mxu0 0.0
        %1421 = vmatpush1.xpose.msra.mxu0 0.0
        %1422 = vmatprep.subr.mxu0 0.0
        %1423 = vmatpush1.xpose.msra.mxu0 0.0
        %1424 = vmatprep.subr.mxu0 0.0
        %1425 = vmatpush1.xpose.msra.mxu0 0.0
        %1426 = vmatprep.subr.mxu0 0.0
        %1427 = vmatpush1.xpose.msra.mxu0 0.0
        %1428 = vmatprep.subr.mxu0 0.0
        %1429 = vmatpush1.xpose.msra.mxu0 0.0
        %1430 = vmatprep.subr.mxu0 0.0
        %1431 = vmatpush1.xpose.msra.mxu0 0.0
        %1432 = vmatprep.subr.mxu0 0.0
        %1433 = vmatpush1.xpose.msra.mxu0 0.0
        %1434 = vmatprep.subr.mxu0 0.0
        %1435 = vmatpush1.xpose.msra.mxu0 0.0
        %1436 = vmatprep.subr.mxu0 0.0
        %1437 = vmatpush1.xpose.msra.mxu0 0.0
        %1438 = vmatprep.subr.mxu0 0.0
        %1439 = vmatpush1.xpose.msra.mxu0 0.0
        %1440 = vmatprep.subr.mxu0 0.0
        %1441 = vmatpush1.xpose.msra.mxu0 0.0
        %1442 = vmatprep.subr.mxu0 0.0
        %1443 = vmatpush1.xpose.msra.mxu0 0.0
        %1444 = vmatprep.subr.mxu0 0.0
        %1445 = vmatpush1.xpose.msra.mxu0 0.0
        %1446 = vmatprep.subr.mxu0 0.0
        %1447 = vmatpush1.xpose.msra.mxu0 0.0
        %1448 = vmatprep.subr.mxu0 0.0
        %1449 = vmatpush1.xpose.msra.mxu0 0.0
        %1450 = vmatprep.mubr.f32.mxu0 0.0
        %1451 = vmatmul.mubr.f32.gmra.mrb[0].mxu0 %v1382
        %v1452 = vpop.f32.mrb[0].mxu0
        %v1453 = vadd.f32 0.0, %v1452
        %v1454 = vpop.f32.mrb[0].mxu0
        %1455 = vdwg.mxu0
        %v1456 = vsel %vm1307, %v1287, 0
        %v1458 = vsel %vm1307, %v1294, 0
        %1460 = vmatprep.subr.mxu0 0.0
        %1461 = vmatpush1.xpose.msra.mxu0 %v1458
        %1462 = vmatprep.subr.mxu0 0.0
        %1463 = vmatpush1.xpose.msra.mxu0 0.0
        %1464 = vmatprep.subr.mxu0 0.0
        %1465 = vmatpush1.xpose.msra.mxu0 0.0
        %1466 = vmatprep.subr.mxu0 0.0
        %1467 = vmatpush1.xpose.msra.mxu0 0.0
        %1468 = vmatprep.subr.mxu0 0.0
        %1469 = vmatpush1.xpose.msra.mxu0 0.0
        %1470 = vmatprep.subr.mxu0 0.0
        %1471 = vmatpush1.xpose.msra.mxu0 0.0
        %1472 = vmatprep.subr.mxu0 0.0
        %1473 = vmatpush1.xpose.msra.mxu0 0.0
        %1474 = vmatprep.subr.mxu0 0.0
        %1475 = vmatpush1.xpose.msra.mxu0 0.0
        %1476 = vmatprep.subr.mxu0 0.0
        %1477 = vmatpush1.xpose.msra.mxu0 0.0
        %1478 = vmatprep.subr.mxu0 0.0
        %1479 = vmatpush1.xpose.msra.mxu0 0.0
        %1480 = vmatprep.subr.mxu0 0.0
        %1481 = vmatpush1.xpose.msra.mxu0 0.0
        %1482 = vmatprep.subr.mxu0 0.0
        %1483 = vmatpush1.xpose.msra.mxu0 0.0
        %1484 = vmatprep.subr.mxu0 0.0
        %1485 = vmatpush1.xpose.msra.mxu0 0.0
        %1486 = vmatprep.subr.mxu0 0.0
        %1487 = vmatpush1.xpose.msra.mxu0 0.0
        %1488 = vmatprep.subr.mxu0 0.0
        %1489 = vmatpush1.xpose.msra.mxu0 0.0
        %1490 = vmatprep.subr.mxu0 0.0
        %1491 = vmatpush1.xpose.msra.mxu0 0.0
        %1492 = vmatprep.subr.mxu0 0.0
        %1493 = vmatpush1.xpose.msra.mxu0 0.0
        %1494 = vmatprep.subr.mxu0 0.0
        %1495 = vmatpush1.xpose.msra.mxu0 0.0
        %1496 = vmatprep.subr.mxu0 0.0
        %1497 = vmatpush1.xpose.msra.mxu0 0.0
        %1498 = vmatprep.subr.mxu0 0.0
        %1499 = vmatpush1.xpose.msra.mxu0 0.0
        %1500 = vmatprep.subr.mxu0 0.0
        %1501 = vmatpush1.xpose.msra.mxu0 0.0
        %1502 = vmatprep.subr.mxu0 0.0
        %1503 = vmatpush1.xpose.msra.mxu0 0.0
        %1504 = vmatprep.subr.mxu0 0.0
        %1505 = vmatpush1.xpose.msra.mxu0 0.0
        %1506 = vmatprep.subr.mxu0 0.0
        %1507 = vmatpush1.xpose.msra.mxu0 0.0
        %1508 = vmatprep.subr.mxu0 0.0
        %1509 = vmatpush1.xpose.msra.mxu0 0.0
        %1510 = vmatprep.subr.mxu0 0.0
        %1511 = vmatpush1.xpose.msra.mxu0 0.0
        %1512 = vmatprep.subr.mxu0 0.0
        %1513 = vmatpush1.xpose.msra.mxu0 0.0
        %1514 = vmatprep.subr.mxu0 0.0
        %1515 = vmatpush1.xpose.msra.mxu0 0.0
        %1516 = vmatprep.subr.mxu0 0.0
        %1517 = vmatpush1.xpose.msra.mxu0 0.0
        %1518 = vmatprep.subr.mxu0 0.0
        %1519 = vmatpush1.xpose.msra.mxu0 0.0
        %1520 = vmatprep.subr.mxu0 0.0
        %1521 = vmatpush1.xpose.msra.mxu0 0.0
        %1522 = vmatprep.subr.mxu0 0.0
        %1523 = vmatpush1.xpose.msra.mxu0 0.0
        %1524 = vmatprep.mubr.f32.mxu0 0.0
        %1525 = vmatmul.mubr.f32.gmra.mrb[0].mxu0 %v1456
        %v1526 = vpop.f32.mrb[0].mxu0
        %v1527 = vadd.f32 0.0, %v1526
        %v1528 = vpop.f32.mrb[0].mxu0
        %1529 = vdwg.mxu0
        %v1530 = vsel %vm1307, %v1289, 0
        %v1532 = vsel %vm1307, %v1296, 0
        %1534 = vmatprep.subr.mxu0 0.0
        %1535 = vmatpush1.xpose.msra.mxu0 %v1532
        %1536 = vmatprep.subr.mxu0 0.0
        %1537 = vmatpush1.xpose.msra.mxu0 0.0
        %1538 = vmatprep.subr.mxu0 0.0
        %1539 = vmatpush1.xpose.msra.mxu0 0.0
        %1540 = vmatprep.subr.mxu0 0.0
        %1541 = vmatpush1.xpose.msra.mxu0 0.0
        %1542 = vmatprep.subr.mxu0 0.0
        %1543 = vmatpush1.xpose.msra.mxu0 0.0
        %1544 = vmatprep.subr.mxu0 0.0
        %1545 = vmatpush1.xpose.msra.mxu0 0.0
        %1546 = vmatprep.subr.mxu0 0.0
        %1547 = vmatpush1.xpose.msra.mxu0 0.0
        %1548 = vmatprep.subr.mxu0 0.0
        %1549 = vmatpush1.xpose.msra.mxu0 0.0
        %1550 = vmatprep.subr.mxu0 0.0
        %1551 = vmatpush1.xpose.msra.mxu0 0.0
        %1552 = vmatprep.subr.mxu0 0.0
        %1553 = vmatpush1.xpose.msra.mxu0 0.0
        %1554 = vmatprep.subr.mxu0 0.0
        %1555 = vmatpush1.xpose.msra.mxu0 0.0
        %1556 = vmatprep.subr.mxu0 0.0
        %1557 = vmatpush1.xpose.msra.mxu0 0.0
        %1558 = vmatprep.subr.mxu0 0.0
        %1559 = vmatpush1.xpose.msra.mxu0 0.0
        %1560 = vmatprep.subr.mxu0 0.0
        %1561 = vmatpush1.xpose.msra.mxu0 0.0
        %1562 = vmatprep.subr.mxu0 0.0
        %1563 = vmatpush1.xpose.msra.mxu0 0.0
        %1564 = vmatprep.subr.mxu0 0.0
        %1565 = vmatpush1.xpose.msra.mxu0 0.0
        %1566 = vmatprep.subr.mxu0 0.0
        %1567 = vmatpush1.xpose.msra.mxu0 0.0
        %1568 = vmatprep.subr.mxu0 0.0
        %1569 = vmatpush1.xpose.msra.mxu0 0.0
        %1570 = vmatprep.subr.mxu0 0.0
        %1571 = vmatpush1.xpose.msra.mxu0 0.0
        %1572 = vmatprep.subr.mxu0 0.0
        %1573 = vmatpush1.xpose.msra.mxu0 0.0
        %1574 = vmatprep.subr.mxu0 0.0
        %1575 = vmatpush1.xpose.msra.mxu0 0.0
        %1576 = vmatprep.subr.mxu0 0.0
        %1577 = vmatpush1.xpose.msra.mxu0 0.0
        %1578 = vmatprep.subr.mxu0 0.0
        %1579 = vmatpush1.xpose.msra.mxu0 0.0
        %1580 = vmatprep.subr.mxu0 0.0
        %1581 = vmatpush1.xpose.msra.mxu0 0.0
        %1582 = vmatprep.subr.mxu0 0.0
        %1583 = vmatpush1.xpose.msra.mxu0 0.0
        %1584 = vmatprep.subr.mxu0 0.0
        %1585 = vmatpush1.xpose.msra.mxu0 0.0
        %1586 = vmatprep.subr.mxu0 0.0
        %1587 = vmatpush1.xpose.msra.mxu0 0.0
        %1588 = vmatprep.subr.mxu0 0.0
        %1589 = vmatpush1.xpose.msra.mxu0 0.0
        %1590 = vmatprep.subr.mxu0 0.0
        %1591 = vmatpush1.xpose.msra.mxu0 0.0
        %1592 = vmatprep.subr.mxu0 0.0
        %1593 = vmatpush1.xpose.msra.mxu0 0.0
        %1594 = vmatprep.subr.mxu0 0.0
        %1595 = vmatpush1.xpose.msra.mxu0 0.0
        %1596 = vmatprep.subr.mxu0 0.0
        %1597 = vmatpush1.xpose.msra.mxu0 0.0
        %1598 = vmatprep.mubr.f32.mxu0 0.0
        %1599 = vmatmul.mubr.f32.gmra.mrb[0].mxu0 %v1530
        %v1600 = vpop.f32.mrb[0].mxu0
        %v1601 = vadd.f32 0.0, %v1600
        %v1602 = vpop.f32.mrb[0].mxu0
        %1603 = vdwg.mxu0
        %v1604 = vmul.f32 %v1379, 0.35355338
        %v1605 = vmul.f32 %v1453, 0.35355338
        %v1606 = vmul.f32 %v1527, 0.35355338
        %v1607 = vmul.f32 %v1601, 0.35355338
        %v1608 = vsel %vm1015, 1, 0
        %v1609 = vlaneseq
        %v1610 = vshrl.u32 %v1609, 7
        %v1611 = vsub.s32 0, %v1610
        %v1612 = vrot.slane %v1608, %v1611
        %vm1613 = vcmp.eq.s32.totalorder %v1612, 1
        %v1614 = vsel %vm1613, -1e+09, %v1604
        %v1615 = vsel %vm1613, -1e+09, %v1605
        %v1616 = vsel %vm1613, -1e+09, %v1606
        %v1617 = vsel %vm1613, -1e+09, %v1607
        %v1618 = vsel %vm1307, %v1614, -inf
        %1619 = vmax.xlane.f32.xlu0 %v1618
        %v1620 = vpop.xlane.xlu0 %1619
        %v1621 = vsel %vm1307, %v1615, -inf
        %1622 = vmax.xlane.f32.xlu0 %v1621
        %v1623 = vpop.xlane.xlu0 %1622
        %v1624 = vsel %vm1307, %v1616, -inf
        %1625 = vmax.xlane.f32.xlu0 %v1624
        %v1626 = vpop.xlane.xlu0 %1625
        %v1627 = vsel %vm1307, %v1617, -inf
        %1628 = vmax.xlane.f32.xlu0 %v1627
        %v1629 = vpop.xlane.xlu0 %1628
        %v1630 = vsub.f32 %v1614, %v1620
        %v1631 = vsub.f32 %v1615, %v1623
        %v1632 = vsub.f32 %v1616, %v1626
        %v1633 = vsub.f32 %v1617, %v1629
        %v1634 = vmul.f32 %v1630, 1.442695
        %v1635 = vpow.pop %v1634
        %v1636 = vmul.f32 %v1631, 1.442695
        %v1637 = vpow.pop %v1636
        %v1638 = vmul.f32 %v1632, 1.442695
        %v1639 = vpow.pop %v1638
        %v1640 = vmul.f32 %v1633, 1.442695
        %v1641 = vpow.pop %v1640
        %v1642 = vsel %vm1307, %v1635, 0.0
        %1643 = vadd.xlane.f32.xlu0 %v1642
        %v1644 = vpop.xlane.xlu0 %1643
        %v1645 = vsel %vm1307, %v1637, 0.0
        %1646 = vadd.xlane.f32.xlu0 %v1645
        %v1647 = vpop.xlane.xlu0 %1646
        %v1648 = vsel %vm1307, %v1639, 0.0
        %1649 = vadd.xlane.f32.xlu0 %v1648
        %v1650 = vpop.xlane.xlu0 %1649
        %v1651 = vsel %vm1307, %v1641, 0.0
        %1652 = vadd.xlane.f32.xlu0 %v1651
        %v1653 = vpop.xlane.xlu0 %1652
        %v1654 = vrcp.pop %v1644
        %v1655 = vrcp.pop %v1647
        %v1656 = vrcp.pop %v1650
        %v1657 = vrcp.pop %v1653
        %v1658 = vmul.f32 %v1635, %v1654
        %v1659 = vmul.f32 %v1637, %v1655
        %v1660 = vmul.f32 %v1639, %v1656
        %v1661 = vmul.f32 %v1641, %v1657
        %v1663 = vsel %vm1307, %v1658, 0
        %1665 = vmatprep.subr.mxu0 0.0
        %1666 = vmatpush1.msra.mxu0 %v1280
        %1667 = vmatprep.subr.mxu0 0.0
        %1668 = vmatpush1.msra.mxu0 0.0
        %1669 = vmatprep.subr.mxu0 0.0
        %1670 = vmatpush1.msra.mxu0 0.0
        %1671 = vmatprep.subr.mxu0 0.0
        %1672 = vmatpush1.msra.mxu0 0.0
        %1673 = vmatprep.subr.mxu0 0.0
        %1674 = vmatpush1.msra.mxu0 0.0
        %1675 = vmatprep.subr.mxu0 0.0
        %1676 = vmatpush1.msra.mxu0 0.0
        %1677 = vmatprep.subr.mxu0 0.0
        %1678 = vmatpush1.msra.mxu0 0.0
        %1679 = vmatprep.subr.mxu0 0.0
        %1680 = vmatpush1.msra.mxu0 0.0
        %1681 = vmatprep.subr.mxu0 0.0
        %1682 = vmatpush1.msra.mxu0 0.0
        %1683 = vmatprep.subr.mxu0 0.0
        %1684 = vmatpush1.msra.mxu0 0.0
        %1685 = vmatprep.subr.mxu0 0.0
        %1686 = vmatpush1.msra.mxu0 0.0
        %1687 = vmatprep.subr.mxu0 0.0
        %1688 = vmatpush1.msra.mxu0 0.0
        %1689 = vmatprep.subr.mxu0 0.0
        %1690 = vmatpush1.msra.mxu0 0.0
        %1691 = vmatprep.subr.mxu0 0.0
        %1692 = vmatpush1.msra.mxu0 0.0
        %1693 = vmatprep.subr.mxu0 0.0
        %1694 = vmatpush1.msra.mxu0 0.0
        %1695 = vmatprep.subr.mxu0 0.0
        %1696 = vmatpush1.msra.mxu0 0.0
        %1697 = vmatprep.subr.mxu0 0.0
        %1698 = vmatpush1.msra.mxu0 0.0
        %1699 = vmatprep.subr.mxu0 0.0
        %1700 = vmatpush1.msra.mxu0 0.0
        %1701 = vmatprep.subr.mxu0 0.0
        %1702 = vmatpush1.msra.mxu0 0.0
        %1703 = vmatprep.subr.mxu0 0.0
        %1704 = vmatpush1.msra.mxu0 0.0
        %1705 = vmatprep.subr.mxu0 0.0
        %1706 = vmatpush1.msra.mxu0 0.0
        %1707 = vmatprep.subr.mxu0 0.0
        %1708 = vmatpush1.msra.mxu0 0.0
        %1709 = vmatprep.subr.mxu0 0.0
        %1710 = vmatpush1.msra.mxu0 0.0
        %1711 = vmatprep.subr.mxu0 0.0
        %1712 = vmatpush1.msra.mxu0 0.0
        %1713 = vmatprep.subr.mxu0 0.0
        %1714 = vmatpush1.msra.mxu0 0.0
        %1715 = vmatprep.subr.mxu0 0.0
        %1716 = vmatpush1.msra.mxu0 0.0
        %1717 = vmatprep.subr.mxu0 0.0
        %1718 = vmatpush1.msra.mxu0 0.0
        %1719 = vmatprep.subr.mxu0 0.0
        %1720 = vmatpush1.msra.mxu0 0.0
        %1721 = vmatprep.subr.mxu0 0.0
        %1722 = vmatpush1.msra.mxu0 0.0
        %1723 = vmatprep.subr.mxu0 0.0
        %1724 = vmatpush1.msra.mxu0 0.0
        %1725 = vmatprep.subr.mxu0 0.0
        %1726 = vmatpush1.msra.mxu0 0.0
        %1727 = vmatprep.subr.mxu0 0.0
        %1728 = vmatpush1.msra.mxu0 0.0
        %1729 = vmatprep.mubr.f32.mxu0 0.0
        %1730 = vmatmul.mubr.f32.gmra.mrb[0].mxu0 %v1663
        %v1731 = vpop.f32.mrb[0].mxu0
        %v1732 = vadd.f32 0.0, %v1731
        %v1733 = vpop.f32.mrb[0].mxu0
        %1734 = vdwg.mxu0
        %v1736 = vsel %vm1307, %v1659, 0
        %1738 = vmatprep.subr.mxu0 0.0
        %1739 = vmatpush1.msra.mxu0 %v1299
        %1740 = vmatprep.subr.mxu0 0.0
        %1741 = vmatpush1.msra.mxu0 0.0
        %1742 = vmatprep.subr.mxu0 0.0
        %1743 = vmatpush1.msra.mxu0 0.0
        %1744 = vmatprep.subr.mxu0 0.0
        %1745 = vmatpush1.msra.mxu0 0.0
        %1746 = vmatprep.subr.mxu0 0.0
        %1747 = vmatpush1.msra.mxu0 0.0
        %1748 = vmatprep.subr.mxu0 0.0
        %1749 = vmatpush1.msra.mxu0 0.0
        %1750 = vmatprep.subr.mxu0 0.0
        %1751 = vmatpush1.msra.mxu0 0.0
        %1752 = vmatprep.subr.mxu0 0.0
        %1753 = vmatpush1.msra.mxu0 0.0
        %1754 = vmatprep.subr.mxu0 0.0
        %1755 = vmatpush1.msra.mxu0 0.0
        %1756 = vmatprep.subr.mxu0 0.0
        %1757 = vmatpush1.msra.mxu0 0.0
        %1758 = vmatprep.subr.mxu0 0.0
        %1759 = vmatpush1.msra.mxu0 0.0
        %1760 = vmatprep.subr.mxu0 0.0
        %1761 = vmatpush1.msra.mxu0 0.0
        %1762 = vmatprep.subr.mxu0 0.0
        %1763 = vmatpush1.msra.mxu0 0.0
        %1764 = vmatprep.subr.mxu0 0.0
        %1765 = vmatpush1.msra.mxu0 0.0
        %1766 = vmatprep.subr.mxu0 0.0
        %1767 = vmatpush1.msra.mxu0 0.0
        %1768 = vmatprep.subr.mxu0 0.0
        %1769 = vmatpush1.msra.mxu0 0.0
        %1770 = vmatprep.subr.mxu0 0.0
        %1771 = vmatpush1.msra.mxu0 0.0
        %1772 = vmatprep.subr.mxu0 0.0
        %1773 = vmatpush1.msra.mxu0 0.0
        %1774 = vmatprep.subr.mxu0 0.0
        %1775 = vmatpush1.msra.mxu0 0.0
        %1776 = vmatprep.subr.mxu0 0.0
        %1777 = vmatpush1.msra.mxu0 0.0
        %1778 = vmatprep.subr.mxu0 0.0
        %1779 = vmatpush1.msra.mxu0 0.0
        %1780 = vmatprep.subr.mxu0 0.0
        %1781 = vmatpush1.msra.mxu0 0.0
        %1782 = vmatprep.subr.mxu0 0.0
        %1783 = vmatpush1.msra.mxu0 0.0
        %1784 = vmatprep.subr.mxu0 0.0
        %1785 = vmatpush1.msra.mxu0 0.0
        %1786 = vmatprep.subr.mxu0 0.0
        %1787 = vmatpush1.msra.mxu0 0.0
        %1788 = vmatprep.subr.mxu0 0.0
        %1789 = vmatpush1.msra.mxu0 0.0
        %1790 = vmatprep.subr.mxu0 0.0
        %1791 = vmatpush1.msra.mxu0 0.0
        %1792 = vmatprep.subr.mxu0 0.0
        %1793 = vmatpush1.msra.mxu0 0.0
        %1794 = vmatprep.subr.mxu0 0.0
        %1795 = vmatpush1.msra.mxu0 0.0
        %1796 = vmatprep.subr.mxu0 0.0
        %1797 = vmatpush1.msra.mxu0 0.0
        %1798 = vmatprep.subr.mxu0 0.0
        %1799 = vmatpush1.msra.mxu0 0.0
        %1800 = vmatprep.subr.mxu0 0.0
        %1801 = vmatpush1.msra.mxu0 0.0
        %1802 = vmatprep.mubr.f32.mxu0 0.0
        %1803 = vmatmul.mubr.f32.gmra.mrb[0].mxu0 %v1736
        %v1804 = vpop.f32.mrb[0].mxu0
        %v1805 = vadd.f32 0.0, %v1804
        %v1806 = vpop.f32.mrb[0].mxu0
        %1807 = vdwg.mxu0
        %v1809 = vsel %vm1307, %v1660, 0
        %1811 = vmatprep.subr.mxu0 0.0
        %1812 = vmatpush1.msra.mxu0 %v1302
        %1813 = vmatprep.subr.mxu0 0.0
        %1814 = vmatpush1.msra.mxu0 0.0
        %1815 = vmatprep.subr.mxu0 0.0
        %1816 = vmatpush1.msra.mxu0 0.0
        %1817 = vmatprep.subr.mxu0 0.0
        %1818 = vmatpush1.msra.mxu0 0.0
        %1819 = vmatprep.subr.mxu0 0.0
        %1820 = vmatpush1.msra.mxu0 0.0
        %1821 = vmatprep.subr.mxu0 0.0
        %1822 = vmatpush1.msra.mxu0 0.0
        %1823 = vmatprep.subr.mxu0 0.0
        %1824 = vmatpush1.msra.mxu0 0.0
        %1825 = vmatprep.subr.mxu0 0.0
        %1826 = vmatpush1.msra.mxu0 0.0
        %1827 = vmatprep.subr.mxu0 0.0
        %1828 = vmatpush1.msra.mxu0 0.0
        %1829 = vmatprep.subr.mxu0 0.0
        %1830 = vmatpush1.msra.mxu0 0.0
        %1831 = vmatprep.subr.mxu0 0.0
        %1832 = vmatpush1.msra.mxu0 0.0
        %1833 = vmatprep.subr.mxu0 0.0
        %1834 = vmatpush1.msra.mxu0 0.0
        %1835 = vmatprep.subr.mxu0 0.0
        %1836 = vmatpush1.msra.mxu0 0.0
        %1837 = vmatprep.subr.mxu0 0.0
        %1838 = vmatpush1.msra.mxu0 0.0
        %1839 = vmatprep.subr.mxu0 0.0
        %1840 = vmatpush1.msra.mxu0 0.0
        %1841 = vmatprep.subr.mxu0 0.0
        %1842 = vmatpush1.msra.mxu0 0.0
        %1843 = vmatprep.subr.mxu0 0.0
        %1844 = vmatpush1.msra.mxu0 0.0
        %1845 = vmatprep.subr.mxu0 0.0
        %1846 = vmatpush1.msra.mxu0 0.0
        %1847 = vmatprep.subr.mxu0 0.0
        %1848 = vmatpush1.msra.mxu0 0.0
        %1849 = vmatprep.subr.mxu0 0.0
        %1850 = vmatpush1.msra.mxu0 0.0
        %1851 = vmatprep.subr.mxu0 0.0
        %1852 = vmatpush1.msra.mxu0 0.0
        %1853 = vmatprep.subr.mxu0 0.0
        %1854 = vmatpush1.msra.mxu0 0.0
        %1855 = vmatprep.subr.mxu0 0.0
        %1856 = vmatpush1.msra.mxu0 0.0
        %1857 = vmatprep.subr.mxu0 0.0
        %1858 = vmatpush1.msra.mxu0 0.0
        %1859 = vmatprep.subr.mxu0 0.0
        %1860 = vmatpush1.msra.mxu0 0.0
        %1861 = vmatprep.subr.mxu0 0.0
        %1862 = vmatpush1.msra.mxu0 0.0
        %1863 = vmatprep.subr.mxu0 0.0
        %1864 = vmatpush1.msra.mxu0 0.0
        %1865 = vmatprep.subr.mxu0 0.0
        %1866 = vmatpush1.msra.mxu0 0.0
        %1867 = vmatprep.subr.mxu0 0.0
        %1868 = vmatpush1.msra.mxu0 0.0
        %1869 = vmatprep.subr.mxu0 0.0
        %1870 = vmatpush1.msra.mxu0 0.0
        %1871 = vmatprep.subr.mxu0 0.0
        %1872 = vmatpush1.msra.mxu0 0.0
        %1873 = vmatprep.subr.mxu0 0.0
        %1874 = vmatpush1.msra.mxu0 0.0
        %1875 = vmatprep.mubr.f32.mxu0 0.0
        %1876 = vmatmul.mubr.f32.gmra.mrb[0].mxu0 %v1809
        %v1877 = vpop.f32.mrb[0].mxu0
        %v1878 = vadd.f32 0.0, %v1877
        %v1879 = vpop.f32.mrb[0].mxu0
        %1880 = vdwg.mxu0
        %v1882 = vsel %vm1307, %v1661, 0
        %1884 = vmatprep.subr.mxu0 0.0
        %1885 = vmatpush1.msra.mxu0 %v1305
        %1886 = vmatprep.subr.mxu0 0.0
        %1887 = vmatpush1.msra.mxu0 0.0
        %1888 = vmatprep.subr.mxu0 0.0
        %1889 = vmatpush1.msra.mxu0 0.0
        %1890 = vmatprep.subr.mxu0 0.0
        %1891 = vmatpush1.msra.mxu0 0.0
        %1892 = vmatprep.subr.mxu0 0.0
        %1893 = vmatpush1.msra.mxu0 0.0
        %1894 = vmatprep.subr.mxu0 0.0
        %1895 = vmatpush1.msra.mxu0 0.0
        %1896 = vmatprep.subr.mxu0 0.0
        %1897 = vmatpush1.msra.mxu0 0.0
        %1898 = vmatprep.subr.mxu0 0.0
        %1899 = vmatpush1.msra.mxu0 0.0
        %1900 = vmatprep.subr.mxu0 0.0
        %1901 = vmatpush1.msra.mxu0 0.0
        %1902 = vmatprep.subr.mxu0 0.0
        %1903 = vmatpush1.msra.mxu0 0.0
        %1904 = vmatprep.subr.mxu0 0.0
        %1905 = vmatpush1.msra.mxu0 0.0
        %1906 = vmatprep.subr.mxu0 0.0
        %1907 = vmatpush1.msra.mxu0 0.0
        %1908 = vmatprep.subr.mxu0 0.0
        %1909 = vmatpush1.msra.mxu0 0.0
        %1910 = vmatprep.subr.mxu0 0.0
        %1911 = vmatpush1.msra.mxu0 0.0
        %1912 = vmatprep.subr.mxu0 0.0
        %1913 = vmatpush1.msra.mxu0 0.0
        %1914 = vmatprep.subr.mxu0 0.0
        %1915 = vmatpush1.msra.mxu0 0.0
        %1916 = vmatprep.subr.mxu0 0.0
        %1917 = vmatpush1.msra.mxu0 0.0
        %1918 = vmatprep.subr.mxu0 0.0
        %1919 = vmatpush1.msra.mxu0 0.0
        %1920 = vmatprep.subr.mxu0 0.0
        %1921 = vmatpush1.msra.mxu0 0.0
        %1922 = vmatprep.subr.mxu0 0.0
        %1923 = vmatpush1.msra.mxu0 0.0
        %1924 = vmatprep.subr.mxu0 0.0
        %1925 = vmatpush1.msra.mxu0 0.0
        %1926 = vmatprep.subr.mxu0 0.0
        %1927 = vmatpush1.msra.mxu0 0.0
        %1928 = vmatprep.subr.mxu0 0.0
        %1929 = vmatpush1.msra.mxu0 0.0
        %1930 = vmatprep.subr.mxu0 0.0
        %1931 = vmatpush1.msra.mxu0 0.0
        %1932 = vmatprep.subr.mxu0 0.0
        %1933 = vmatpush1.msra.mxu0 0.0
        %1934 = vmatprep.subr.mxu0 0.0
        %1935 = vmatpush1.msra.mxu0 0.0
        %1936 = vmatprep.subr.mxu0 0.0
        %1937 = vmatpush1.msra.mxu0 0.0
        %1938 = vmatprep.subr.mxu0 0.0
        %1939 = vmatpush1.msra.mxu0 0.0
        %1940 = vmatprep.subr.mxu0 0.0
        %1941 = vmatpush1.msra.mxu0 0.0
        %1942 = vmatprep.subr.mxu0 0.0
        %1943 = vmatpush1.msra.mxu0 0.0
        %1944 = vmatprep.subr.mxu0 0.0
        %1945 = vmatpush1.msra.mxu0 0.0
        %1946 = vmatprep.subr.mxu0 0.0
        %1947 = vmatpush1.msra.mxu0 0.0
        %1948 = vmatprep.mubr.f32.mxu0 0.0
        %1949 = vmatmul.mubr.f32.gmra.mrb[0].mxu0 %v1882
        %v1950 = vpop.f32.mrb[0].mxu0
        %v1951 = vadd.f32 0.0, %v1950
        %v1952 = vpop.f32.mrb[0].mxu0
        %1953 = vdwg.mxu0
        %1955 = vrot.lane.b32.xlu0 %v1805, 8
        %v1956 = vpop.permute.xlu0 %1955
        %1959 = vrot.lane.b32.xlu0 %v1878, 16
        %v1960 = vpop.permute.xlu0 %1959
        %1963 = vrot.lane.b32.xlu0 %v1951, 24
        %v1964 = vpop.permute.xlu0 %1963
        %v1966 = vsel %vm1307, %v1732, %v1956
        %vm1967 = vcmask 130048
        %v1968 = vsel %vm1967, %v1966, %v1960
        %vm1969 = vcmask 195584
        %v1970 = vsel %vm1969, %v1968, %v1964
        %v1972 = vlaneseq
        %v1973 = vshrl.u32 %v1972, 7
        %v1974 = vsub.s32 0, %v1973
        %v1975 = vrot.slane %v995, %v1974
        %v1978 = vsel %vm1016, %v1970, 0
        %1980 = vmatprep.subr.mxu0 0.0
        %1981 = vmatpush1.msra.mxu0 %v988
        %1982 = vmatprep.subr.mxu0 0.0
        %1983 = vmatpush1.msra.mxu0 %v989
        %1984 = vmatprep.subr.mxu0 0.0
        %1985 = vmatpush1.msra.mxu0 %v990
        %1986 = vmatprep.subr.mxu0 0.0
        %1987 = vmatpush1.msra.mxu0 %v991
        %1988 = vmatprep.subr.mxu0 0.0
        %1989 = vmatpush1.msra.mxu0 0.0
        %1990 = vmatprep.subr.mxu0 0.0
        %1991 = vmatpush1.msra.mxu0 0.0
        %1992 = vmatprep.subr.mxu0 0.0
        %1993 = vmatpush1.msra.mxu0 0.0
        %1994 = vmatprep.subr.mxu0 0.0
        %1995 = vmatpush1.msra.mxu0 0.0
        %1996 = vmatprep.subr.mxu0 0.0
        %1997 = vmatpush1.msra.mxu0 0.0
        %1998 = vmatprep.subr.mxu0 0.0
        %1999 = vmatpush1.msra.mxu0 0.0
        %2000 = vmatprep.subr.mxu0 0.0
        %2001 = vmatpush1.msra.mxu0 0.0
        %2002 = vmatprep.subr.mxu0 0.0
        %2003 = vmatpush1.msra.mxu0 0.0
        %2004 = vmatprep.subr.mxu0 0.0
        %2005 = vmatpush1.msra.mxu0 0.0
        %2006 = vmatprep.subr.mxu0 0.0
        %2007 = vmatpush1.msra.mxu0 0.0
        %2008 = vmatprep.subr.mxu0 0.0
        %2009 = vmatpush1.msra.mxu0 0.0
        %2010 = vmatprep.subr.mxu0 0.0
        %2011 = vmatpush1.msra.mxu0 0.0
        %2012 = vmatprep.subr.mxu0 0.0
        %2013 = vmatpush1.msra.mxu0 0.0
        %2014 = vmatprep.subr.mxu0 0.0
        %2015 = vmatpush1.msra.mxu0 0.0
        %2016 = vmatprep.subr.mxu0 0.0
        %2017 = vmatpush1.msra.mxu0 0.0
        %2018 = vmatprep.subr.mxu0 0.0
        %2019 = vmatpush1.msra.mxu0 0.0
        %2020 = vmatprep.subr.mxu0 0.0
        %2021 = vmatpush1.msra.mxu0 0.0
        %2022 = vmatprep.subr.mxu0 0.0
        %2023 = vmatpush1.msra.mxu0 0.0
        %2024 = vmatprep.subr.mxu0 0.0
        %2025 = vmatpush1.msra.mxu0 0.0
        %2026 = vmatprep.subr.mxu0 0.0
        %2027 = vmatpush1.msra.mxu0 0.0
        %2028 = vmatprep.subr.mxu0 0.0
        %2029 = vmatpush1.msra.mxu0 0.0
        %2030 = vmatprep.subr.mxu0 0.0
        %2031 = vmatpush1.msra.mxu0 0.0
        %2032 = vmatprep.subr.mxu0 0.0
        %2033 = vmatpush1.msra.mxu0 0.0
        %2034 = vmatprep.subr.mxu0 0.0
        %2035 = vmatpush1.msra.mxu0 0.0
        %2036 = vmatprep.subr.mxu0 0.0
        %2037 = vmatpush1.msra.mxu0 0.0
        %2038 = vmatprep.subr.mxu0 0.0
        %2039 = vmatpush1.msra.mxu0 0.0
        %2040 = vmatprep.subr.mxu0 0.0
        %2041 = vmatpush1.msra.mxu0 0.0
        %2042 = vmatprep.subr.mxu0 0.0
        %2043 = vmatpush1.msra.mxu0 0.0
        %2044 = vmatprep.mubr.f32.mxu0 0.0
        %2045 = vmatmul.mubr.f32.gmra.mrb[0].mxu0 %v1978
        %v2046 = vpop.f32.mrb[0].mxu0
        %v2047 = vadd.f32 %v1975, %v2046
        %v2048 = vpop.f32.mrb[0].mxu0
        %2049 = vdwg.mxu0
        %v2050 = vadd.f32 %v975, %v2047
        %v2051 = vsel %vm1016, %v2050, 0.0
        %2052 = vadd.xlane.f32.xlu0 %v2051
        %v2053 = vpop.xlane.xlu0 %2052
        %v2054 = vmul.f32 %v2053, %v1020
        %v2055 = vsub.f32 %v2050, %v2054
        %v2056 = vmul.f32 %v2055, %v2055
        %v2057 = vsel %vm1016, %v2056, 0.0
        %2058 = vadd.xlane.f32.xlu0 %v2057
        %v2059 = vpop.xlane.xlu0 %2058
        %v2060 = vmul.f32 %v2059, 0.032258064
        %v2061 = vrsqrt.pop %v2060
        %v2062 = vmul.f32 %v2060, %v2061
        %vm2063 = vcmp.eq.f32.partialorder %v2060, inf
        %v2064 = vsel %vm2063, %v2060, %v2062
        %vm2065 = vcmp.eq.f32.partialorder %v2060, 0.0
        %v2066 = vand.u32 %v2060, 2147483648
        %v2067 = vsel %vm2065, %v2066, %v2064
        %v2068 = vadd.f32 %v2067, 1e-06
        %v2069 = vrcp.pop %v2068
        %v2071 = vlaneseq
        %v2072 = vshrl.u32 %v2071, 7
        %v2073 = vsub.s32 0, %v2072
        %v2074 = vrot.slane %v998, %v2073
        %v2076 = vmul.f32 %v2074, %v2055
        %v2077 = vmul.f32 %v2076, %v2069
        %v2079 = vlaneseq
        %v2080 = vshrl.u32 %v2079, 7
        %v2081 = vsub.s32 0, %v2080
        %v2082 = vrot.slane %v999, %v2081
        %v2084 = vadd.f32 %v2077, %v2082
        %v2086 = vlaneseq
        %v2087 = vshrl.u32 %v2086, 7
        %v2088 = vsub.s32 0, %v2087
        %v2089 = vrot.slane %v1004, %v2088
        %v2092 = vsel %vm1016, %v2084, 0
        %2094 = vmatprep.subr.mxu0 0.0
        %2095 = vmatpush1.msra.mxu0 %v1000
        %2096 = vmatprep.subr.mxu0 0.0
        %2097 = vmatpush1.msra.mxu0 %v1001
        %2098 = vmatprep.subr.mxu0 0.0
        %2099 = vmatpush1.msra.mxu0 %v1002
        %2100 = vmatprep.subr.mxu0 0.0
        %2101 = vmatpush1.msra.mxu0 %v1003
        %2102 = vmatprep.subr.mxu0 0.0
        %2103 = vmatpush1.msra.mxu0 0.0
        %2104 = vmatprep.subr.mxu0 0.0
        %2105 = vmatpush1.msra.mxu0 0.0
        %2106 = vmatprep.subr.mxu0 0.0
        %2107 = vmatpush1.msra.mxu0 0.0
        %2108 = vmatprep.subr.mxu0 0.0
        %2109 = vmatpush1.msra.mxu0 0.0
        %2110 = vmatprep.subr.mxu0 0.0
        %2111 = vmatpush1.msra.mxu0 0.0
        %2112 = vmatprep.subr.mxu0 0.0
        %2113 = vmatpush1.msra.mxu0 0.0
        %2114 = vmatprep.subr.mxu0 0.0
        %2115 = vmatpush1.msra.mxu0 0.0
        %2116 = vmatprep.subr.mxu0 0.0
        %2117 = vmatpush1.msra.mxu0 0.0
        %2118 = vmatprep.subr.mxu0 0.0
        %2119 = vmatpush1.msra.mxu0 0.0
        %2120 = vmatprep.subr.mxu0 0.0
        %2121 = vmatpush1.msra.mxu0 0.0
        %2122 = vmatprep.subr.mxu0 0.0
        %2123 = vmatpush1.msra.mxu0 0.0
        %2124 = vmatprep.subr.mxu0 0.0
        %2125 = vmatpush1.msra.mxu0 0.0
        %2126 = vmatprep.subr.mxu0 0.0
        %2127 = vmatpush1.msra.mxu0 0.0
        %2128 = vmatprep.subr.mxu0 0.0
        %2129 = vmatpush1.msra.mxu0 0.0
        %2130 = vmatprep.subr.mxu0 0.0
        %2131 = vmatpush1.msra.mxu0 0.0
        %2132 = vmatprep.subr.mxu0 0.0
        %2133 = vmatpush1.msra.mxu0 0.0
        %2134 = vmatprep.subr.mxu0 0.0
        %2135 = vmatpush1.msra.mxu0 0.0
        %2136 = vmatprep.subr.mxu0 0.0
        %2137 = vmatpush1.msra.mxu0 0.0
        %2138 = vmatprep.subr.mxu0 0.0
        %2139 = vmatpush1.msra.mxu0 0.0
        %2140 = vmatprep.subr.mxu0 0.0
        %2141 = vmatpush1.msra.mxu0 0.0
        %2142 = vmatprep.subr.mxu0 0.0
        %2143 = vmatpush1.msra.mxu0 0.0
        %2144 = vmatprep.subr.mxu0 0.0
        %2145 = vmatpush1.msra.mxu0 0.0
        %2146 = vmatprep.subr.mxu0 0.0
        %2147 = vmatpush1.msra.mxu0 0.0
        %2148 = vmatprep.subr.mxu0 0.0
        %2149 = vmatpush1.msra.mxu0 0.0
        %2150 = vmatprep.subr.mxu0 0.0
        %2151 = vmatpush1.msra.mxu0 0.0
        %2152 = vmatprep.subr.mxu0 0.0
        %2153 = vmatpush1.msra.mxu0 0.0
        %2154 = vmatprep.subr.mxu0 0.0
        %2155 = vmatpush1.msra.mxu0 0.0
        %2156 = vmatprep.subr.mxu0 0.0
        %2157 = vmatpush1.msra.mxu0 0.0
        %2158 = vmatprep.mubr.f32.mxu0 0.0
        %2159 = vmatmul.mubr.f32.gmra.mrb[0].mxu0 %v2092
        %v2160 = vpop.f32.mrb[0].mxu0
        %v2161 = vadd.f32 %v2089, %v2160
        %v2162 = vpop.f32.mrb[0].mxu0
        %2163 = vdwg.mxu0
        %v2164 = vmax.f32 %v2161, 0.0
        %v2166 = vlaneseq
        %v2167 = vshrl.u32 %v2166, 7
        %v2168 = vsub.s32 0, %v2167
        %v2169 = vrot.slane %v1013, %v2168
        %vm2171 = vcmask 523264
        %v2173 = vsel %vm2171, %v2164, 0
        %2175 = vmatprep.subr.mxu0 0.0
        %2176 = vmatpush1.msra.mxu0 %v1005
        %2177 = vmatprep.subr.mxu0 0.0
        %2178 = vmatpush1.msra.mxu0 %v1006
        %2179 = vmatprep.subr.mxu0 0.0
        %2180 = vmatpush1.msra.mxu0 %v1007
        %2181 = vmatprep.subr.mxu0 0.0
        %2182 = vmatpush1.msra.mxu0 %v1008
        %2183 = vmatprep.subr.mxu0 0.0
        %2184 = vmatpush1.msra.mxu0 %v1009
        %2185 = vmatprep.subr.mxu0 0.0
        %2186 = vmatpush1.msra.mxu0 %v1010
        %2187 = vmatprep.subr.mxu0 0.0
        %2188 = vmatpush1.msra.mxu0 %v1011
        %2189 = vmatprep.subr.mxu0 0.0
        %2190 = vmatpush1.msra.mxu0 %v1012
        %2191 = vmatprep.subr.mxu0 0.0
        %2192 = vmatpush1.msra.mxu0 0.0
        %2193 = vmatprep.subr.mxu0 0.0
        %2194 = vmatpush1.msra.mxu0 0.0
        %2195 = vmatprep.subr.mxu0 0.0
        %2196 = vmatpush1.msra.mxu0 0.0
        %2197 = vmatprep.subr.mxu0 0.0
        %2198 = vmatpush1.msra.mxu0 0.0
        %2199 = vmatprep.subr.mxu0 0.0
        %2200 = vmatpush1.msra.mxu0 0.0
        %2201 = vmatprep.subr.mxu0 0.0
        %2202 = vmatpush1.msra.mxu0 0.0
        %2203 = vmatprep.subr.mxu0 0.0
        %2204 = vmatpush1.msra.mxu0 0.0
        %2205 = vmatprep.subr.mxu0 0.0
        %2206 = vmatpush1.msra.mxu0 0.0
        %2207 = vmatprep.subr.mxu0 0.0
        %2208 = vmatpush1.msra.mxu0 0.0
        %2209 = vmatprep.subr.mxu0 0.0
        %2210 = vmatpush1.msra.mxu0 0.0
        %2211 = vmatprep.subr.mxu0 0.0
        %2212 = vmatpush1.msra.mxu0 0.0
        %2213 = vmatprep.subr.mxu0 0.0
        %2214 = vmatpush1.msra.mxu0 0.0
        %2215 = vmatprep.subr.mxu0 0.0
        %2216 = vmatpush1.msra.mxu0 0.0
        %2217 = vmatprep.subr.mxu0 0.0
        %2218 = vmatpush1.msra.mxu0 0.0
        %2219 = vmatprep.subr.mxu0 0.0
        %2220 = vmatpush1.msra.mxu0 0.0
        %2221 = vmatprep.subr.mxu0 0.0
        %2222 = vmatpush1.msra.mxu0 0.0
        %2223 = vmatprep.subr.mxu0 0.0
        %2224 = vmatpush1.msra.mxu0 0.0
        %2225 = vmatprep.subr.mxu0 0.0
        %2226 = vmatpush1.msra.mxu0 0.0
        %2227 = vmatprep.subr.mxu0 0.0
        %2228 = vmatpush1.msra.mxu0 0.0
        %2229 = vmatprep.subr.mxu0 0.0
        %2230 = vmatpush1.msra.mxu0 0.0
        %2231 = vmatprep.subr.mxu0 0.0
        %2232 = vmatpush1.msra.mxu0 0.0
        %2233 = vmatprep.subr.mxu0 0.0
        %2234 = vmatpush1.msra.mxu0 0.0
        %2235 = vmatprep.subr.mxu0 0.0
        %2236 = vmatpush1.msra.mxu0 0.0
        %2237 = vmatprep.subr.mxu0 0.0
        %2238 = vmatpush1.msra.mxu0 0.0
        %2239 = vmatprep.mubr.f32.mxu0 0.0
        %2240 = vmatmul.mubr.f32.gmra.mrb[0].mxu0 %v2173
        %v2241 = vpop.f32.mrb[0].mxu0
        %v2242 = vadd.f32 %v2169, %v2241
        %v2243 = vpop.f32.mrb[0].mxu0
        %2244 = vdwg.mxu0
        %v2245 = vadd.f32 %v2050, %v2242
        %2246 = vst.msk [vmem:[#allocation2] sm:$0xff] %vm1016, %v2245
        %p2247 = scmp.eq.s32.totalorder %s45, 1
        // Predicated region
        $region117: #{tpu_custom_call.1} parent=99 // pred_check
          %p2248 = pneg %p2247
        $region118: #{tpu_custom_call.1} parent=99 // pred_check_branch
          %2250 = sbr.rel (%p2248) target = $region120
        $region119: #{tpu_custom_call.1} parent=99 // pred_region
          %v2251 = vld [vmem:[%s18] sm:$0x1]
          %v2252 = vld [vmem:[%s19] sm:$0x1]
          %v2253 = vsel %vm1016, %v2245, 0.0
          %2254 = vadd.xlane.f32.xlu0 %v2253
          %v2255 = vpop.xlane.xlu0 %2254
          %v2256 = vmul.f32 %v2255, %v1020
          %v2257 = vsub.f32 %v2245, %v2256
          %v2258 = vmul.f32 %v2257, %v2257
          %v2259 = vsel %vm1016, %v2258, 0.0
          %2260 = vadd.xlane.f32.xlu0 %v2259
          %v2261 = vpop.xlane.xlu0 %2260
          %v2262 = vmul.f32 %v2261, 0.032258064
          %v2263 = vrsqrt.pop %v2262
          %v2264 = vmul.f32 %v2262, %v2263
          %vm2265 = vcmp.eq.f32.partialorder %v2262, inf
          %v2266 = vsel %vm2265, %v2262, %v2264
          %vm2267 = vcmp.eq.f32.partialorder %v2262, 0.0
          %v2268 = vand.u32 %v2262, 2147483648
          %v2269 = vsel %vm2267, %v2268, %v2266
          %v2270 = vadd.f32 %v2269, 1e-06
          %v2271 = vrcp.pop %v2270
          %v2273 = vlaneseq
          %v2274 = vshrl.u32 %v2273, 7
          %v2275 = vsub.s32 0, %v2274
          %v2276 = vrot.slane %v2251, %v2275
          %v2278 = vmul.f32 %v2276, %v2257
          %v2279 = vmul.f32 %v2278, %v2271
          %v2281 = vlaneseq
          %v2282 = vshrl.u32 %v2281, 7
          %v2283 = vsub.s32 0, %v2282
          %v2284 = vrot.slane %v2252, %v2283
          %v2286 = vadd.f32 %v2279, %v2284
          %2287 = vst.msk [vmem:[%s914] sm:$0xff] %vm1016, %v2286
        $region120: #{tpu_custom_call.1} parent=99 // pred_fallthru
          _
        %s2288 = sand.u32 %s570, 1
        %s2289 = scalar_lea.sflag [#allocation5], %s2288
        %s2290 = sand.u32 %s570, 1
        %s2291 = smul.addr %s2290, 8
        %s2292 = scalar_lea.vmem [#allocation9], %s2291
        // Predicated region
        $region121: #{tpu_custom_call.1} parent=99 // pred_check
          %p2293 = pneg %p580
        $region122: #{tpu_custom_call.1} parent=99 // pred_check_branch
          %2295 = sbr.rel (%p2293) target = $region124
        $region123: #{tpu_custom_call.1} parent=99 // pred_region
          %s2297 = ssub.s32 128, 128
          %2298 = vsyncadd %s2289, %s2297
          %s2299 = smul.addr %s44, 128
          %s2300 = scalar_lea.hbm %s20, %s2299
          %s2302 = sshll.u32 %s2292, 4
          %s2303 = int_to_ptr.vmem [resolvable:$true] %s2302
          %2305 = dma.vmem_to_hbm [thread:$0]  %s2303, 128, %s2300, %s2289
        $region124: #{tpu_custom_call.1} parent=99 // pred_fallthru
          _
      $region100: #{tpu_custom_call.1} parent=5 // pred_fallthru
        _
      %p2306 = scmp.le.s32.totalorder 2, %s35
      // Predicated region
      $region125: #{tpu_custom_call.1} parent=5 // pred_check
        %p2307 = pneg %p2306
      $region126: #{tpu_custom_call.1} parent=5 // pred_check_branch
        %2309 = sbr.rel (%p2307) target = $region128
      $region127: #{tpu_custom_call.1} parent=5 // pred_region
        %s2310 = ssub.s32 %s35, 2
        // Predicated region
        $region129: #{tpu_custom_call.1} parent=127 // pred_check
          %p2311 = pneg %p586
        $region130: #{tpu_custom_call.1} parent=127 // pred_check_branch
          %2313 = sbr.rel (%p2311) target = $region132
        $region131: #{tpu_custom_call.1} parent=127 // pred_region
          %s2314 = sand.u32 %s571, 1
          %s2315 = scalar_lea.sflag [#allocation5], %s2314
          %s2316 = sand.u32 %s571, 1
          %s2317 = smul.addr %s2316, 8
          %s2318 = scalar_lea.vmem [#allocation9], %s2317
          %2319 = dma.done %s2315, 128
        $region132: #{tpu_custom_call.1} parent=127 // pred_fallthru
          _
      $region128: #{tpu_custom_call.1} parent=5 // pred_fallthru
        _
    $region6: #{tpu_custom_call.1} parent=1 // loop_footer
      %s39 = sadd.s32 1, %s35
    $region7: #{tpu_custom_call.1} parent=1 // loop_footer_branch
      %34 = sbr.rel target = $region3
    $region8: #{tpu_custom_call.1} parent=1 // loop_exit
      _
    %2320 = vsyncpa [#allocation4], 1
    %s2321 = scalar_lea.sflag [#allocation4], 1
    %2322 = vsyncpa %s2321, 1
    %2323 = vsyncpa [#allocation7], 1
    %s2324 = scalar_lea.sflag [#allocation7], 1
    %2325 = vsyncpa %s2324, 1
    %2326 = vsyncpa [#allocation5], 1
    %s2327 = scalar_lea.sflag [#allocation5], 1
    %2328 = vsyncpa %s2327, 1

</llo_original>
